<compile_context>
chip_gen: v6e
topology: v6e:2x2x1
jax: 0.10.0
libtpu: 0.0.40
codegen_flags: <defaults>
</compile_context>

<pallas_src>
import functools

import numpy as np
import jax
import jax.numpy as jnp
from jax import lax
from jax.experimental import pallas as pl
from jax.experimental.pallas import tpu as pltpu

LANE = 128  # TPU lane width: embedding/head dim is padded to this for dense stores


# ----------------------------------------------------------------------
# Kernel: one graph (grid step) -> (N, N, LANE) spatial bias (lane-padded heads)
# ----------------------------------------------------------------------
def _spatial_encoder_kernel(nn_ref, adj_ref, emb_ref, out_ref, *, max_dist, n_heads_pad):
    b = pl.program_id(0)
    n = nn_ref[b]                                    # real node count of this graph (SMEM)
    adj = adj_ref[0]                                 # (N, N) f32 dense adjacency
    N = adj.shape[0]

    row = lax.broadcasted_iota(jnp.int32, (N, N), 0)
    col = lax.broadcasted_iota(jnp.int32, (N, N), 1)
    eye = row == col
    valid = (row < n) & (col < n)                    # pairs of real nodes
    has_edge = (adj > 0.0) & valid                   # padded nodes carry no edges

    # BFS via reachability matrix powers:  reach_s[i, j] = (dist(i, j) <= s)
    a_loop = jnp.where(has_edge | eye, 1.0, 0.0).astype(jnp.float32)   # A + I
    dist0 = jnp.where(eye, 0, jnp.where(has_edge, 1, -1)).astype(jnp.int32)

    def bfs_step(s, carry):
        dist, reach = carry
        reach_new = jnp.dot(reach, a_loop, preferred_element_type=jnp.float32) > 0.0
        dist = jnp.where(reach_new & (dist < 0), s, dist)
        return dist, reach_new.astype(jnp.float32)

    # max shortest-path length is N - 1; unreachable pairs stay at -1
    dist, _ = lax.fori_loop(2, N, bfs_step, (dist0, a_loop), unroll=True)

    # padded rows/cols stay -1 (PyTorch initializes dist = -1 and only fills [:n, :n])
    dist = jnp.where(valid, dist, -1)

    # SpatialEncoder: clamp(dist, -1, max_dist) + 1, embedding lookup (row 0 is zeros)
    idx = jnp.clip(dist, -1, max_dist) + 1           # (N, N) int32 in [0, max_dist + 1]
    emb = emb_ref[...]                               # (max_dist + 2, LANE), lane-padded
    out = jnp.zeros((N, N, n_heads_pad), jnp.float32)
    for r in range(max_dist + 2):                    # static, tiny table
        sel = (idx == r).astype(jnp.float32)[:, :, None]
        out = out + sel * emb[r][None, None, :]
    out_ref[0] = out                                 # lane-dense (N, N, 128) store


# ----------------------------------------------------------------------
# Wrapper
# ----------------------------------------------------------------------
def spatial_encoder_batch(adj, num_nodes, emb_table, *, max_dist):
    """adj: (B, N, N) f32 0/1 (zero-padded), num_nodes: (B,) i32,
    emb_table: (max_dist + 2, num_heads) f32 with row 0 == 0 (padding_idx=0).
    Returns (B, N, N, num_heads) f32 spatial position bias."""
    B, N, _ = adj.shape
    T, num_heads = emb_table.shape
    assert T == max_dist + 2

    emb_pad = jnp.zeros((T, LANE), jnp.float32).at[:, :num_heads].set(emb_table)

    kernel = functools.partial(_spatial_encoder_kernel,
                               max_dist=max_dist, n_heads_pad=LANE)
    out_pad = pl.pallas_call(
        kernel,
        out_shape=jax.ShapeDtypeStruct((B, N, N, LANE), jnp.float32),
        grid_spec=pltpu.PrefetchScalarGridSpec(
            num_scalar_prefetch=1,                       # num_nodes -> SMEM
            grid=(B,),
            in_specs=[
                pl.BlockSpec((1, N, N), lambda b, nn: (b, 0, 0)),     # this graph's adj
                pl.BlockSpec((T, LANE), lambda b, nn: (0, 0)),        # table, DMA'd once
            ],
            out_specs=pl.BlockSpec((1, N, N, LANE), lambda b, nn: (b, 0, 0, 0)),
        ),
        compiler_params=pltpu.CompilerParams(dimension_semantics=("parallel",)),
    )(num_nodes, adj, emb_pad)

    return out_pad[:, :, :, :num_heads]


# ----------------------------------------------------------------------
# Pure numpy reference (Floyd-Warshall + table lookup) for validation
# ----------------------------------------------------------------------
def _reference_numpy(adj, num_nodes, emb, max_dist):
    B, N, _ = adj.shape
    nH = emb.shape[1]
    out = np.zeros((B, N, N, nH), np.float32)
    BIG = 1 << 20
    r = np.arange(N)
    for b in range(B):
        n = int(num_nodes[b])
        mask = (r[:, None] < n) & (r[None, :] < n)
        D = np.full((N, N), BIG, dtype=np.int64)
        np.fill_diagonal(D, 0)
        D = np.where((adj[b] > 0) & mask, np.minimum(D, 1), D)
        for k in range(N):
            D = np.minimum(D, D[:, k:k + 1] + D[k:k + 1, :])
        dist = np.where(D >= BIG, -1, D)
        dist = np.where(mask, dist, -1)
        idx = np.clip(dist, -1, max_dist) + 1
        out[b] = emb[idx]
    return out


# ----------------------------------------------------------------------
if __name__ == "__main__":
    B, N = 2, 16                     # batch of graphs, max nodes per graph
    max_dist, num_heads = 2, 4       # SpatialEncoderBatch(max_dist=2, num_heads=4)

    key = jax.random.PRNGKey(0)
    k_adj, k_emb = jax.random.split(key)

    num_nodes = jnp.array([16, 11], dtype=jnp.int32)

    # deterministic random undirected graphs, zero-padded beyond num_nodes
    u = jax.random.uniform(k_adj, (B, N, N))
    a = (u < 0.25)
    a = a | jnp.transpose(a, (0, 2, 1))
    a = a & ~jnp.eye(N, dtype=bool)[None]
    rid = jnp.arange(N)[None, :, None]
    cid = jnp.arange(N)[None, None, :]
    valid = (rid < num_nodes[:, None, None]) & (cid < num_nodes[:, None, None])
    adj = (a & valid).astype(jnp.float32)

    # Embedding(max_dist + 2, num_heads, padding_idx=0): row 0 is all zeros
    emb_table = 0.02 * jax.random.normal(k_emb, (max_dist + 2, num_heads), jnp.float32)
    emb_table = emb_table.at[0].set(0.0)

    bias = spatial_encoder_batch(adj, num_nodes, emb_table, max_dist=max_dist)
    bias = jax.block_until_ready(bias)

    assert bias.shape == (B, N, N, num_heads)
    assert bool(jnp.all(jnp.isfinite(bias)))

    ref = _reference_numpy(np.asarray(adj), np.asarray(num_nodes),
                           np.asarray(emb_table), max_dist)
    np.testing.assert_allclose(np.asarray(bias), ref, rtol=1e-6, atol=1e-6)

    print("KERNEL_OK")
</pallas_src>

<mosaic_0001>
module attributes {stable_mosaic.version = 11 : i64} {
  func.func @_spatial_encoder_kernel(%arg0: i32, %arg1: memref<2xi32, #tpu.memory_space<smem>>, %arg2: memref<1x16x16xf32, #tpu.memory_space<vmem>>, %arg3: memref<4x128xf32, #tpu.memory_space<vmem>>, %arg4: memref<1x16x16x128xf32, #tpu.memory_space<vmem>>) attributes {dimension_semantics = [#tpu.dimension_semantics<parallel>], iteration_bounds = array<i64: 2>, scalar_prefetch = 1 : i64, scratch_operands = 0 : i64, tpu.core_type = #tpu.core_type<tc>, window_params = [{transform_indices = @transform_0, window_bounds = array<i64: 1, 16, 16>}, {pipeline_mode = #tpu.pipeline_mode<synchronous>, transform_indices = @transform_1, window_bounds = array<i64: 4, 128>}, {transform_indices = @transform_2, window_bounds = array<i64: 1, 16, 16, 128>}]} {
    %0 = arith.index_cast %arg0 : i32 to index
    %1 = memref.load %arg1[%0] : memref<2xi32, #tpu.memory_space<smem>>
    %c0 = arith.constant 0 : index
    %c0_0 = arith.constant 0 : index
    %c0_1 = arith.constant 0 : index
    %2 = vector.load %arg2[%c0, %c0_0, %c0_1] : memref<1x16x16xf32, #tpu.memory_space<vmem>>, vector<1x16x16xf32>
    %3 = vector.shape_cast %2 : vector<1x16x16xf32> to vector<16x16xf32>
    %4 = tpu.iota {dimensions = array<i32: 0>} : vector<16x16xi32>
    %5 = tpu.iota {dimensions = array<i32: 1>} : vector<16x16xi32>
    %6 = arith.cmpi eq, %4, %5 : vector<16x16xi32>
    %7 = vector.broadcast %1 : i32 to vector<16x16xi32>
    %8 = arith.cmpi slt, %4, %7 : vector<16x16xi32>
    %9 = vector.broadcast %1 : i32 to vector<16x16xi32>
    %10 = arith.cmpi slt, %5, %9 : vector<16x16xi32>
    %11 = arith.andi %8, %10 : vector<16x16xi1>
    %cst = arith.constant 0.000000e+00 : f32
    %12 = vector.broadcast %cst : f32 to vector<16x16xf32>
    %13 = arith.cmpf ogt, %3, %12 : vector<16x16xf32>
    %14 = arith.andi %13, %11 : vector<16x16xi1>
    %15 = arith.ori %14, %6 : vector<16x16xi1>
    %cst_2 = arith.constant 1.000000e+00 : f32
    %cst_3 = arith.constant 0.000000e+00 : f32
    %16 = vector.broadcast %cst_2 : f32 to vector<16x16xf32>
    %17 = vector.broadcast %cst_3 : f32 to vector<16x16xf32>
    %18 = arith.select %15, %16, %17 : vector<16x16xi1>, vector<16x16xf32>
    %c1_i32 = arith.constant 1 : i32
    %c-1_i32 = arith.constant -1 : i32
    %19 = vector.broadcast %c1_i32 : i32 to vector<16x16xi32>
    %20 = vector.broadcast %c-1_i32 : i32 to vector<16x16xi32>
    %21 = arith.select %14, %19, %20 : vector<16x16xi1>, vector<16x16xi32>
    %c0_i32 = arith.constant 0 : i32
    %22 = vector.broadcast %c0_i32 : i32 to vector<16x16xi32>
    %23 = arith.select %6, %22, %21 : vector<16x16xi1>, vector<16x16xi32>
    %c2_i32 = arith.constant 2 : i32
    %cst_4 = arith.constant dense<0.000000e+00> : vector<16x16xf32>
    %24 = tpu.matmul %18, %18, %cst_4 {dimension_numbers = #tpu.dot_dimension_numbers<[1], [0], [0], [1], [0, 0, 1, 1], [], []>} : vector<16x16xf32>, vector<16x16xf32>, vector<16x16xf32> -> vector<16x16xf32>
    %cst_5 = arith.constant 0.000000e+00 : f32
    %25 = vector.broadcast %cst_5 : f32 to vector<16x16xf32>
    %26 = arith.cmpf ogt, %24, %25 : vector<16x16xf32>
    %c0_i32_6 = arith.constant 0 : i32
    %27 = vector.broadcast %c0_i32_6 : i32 to vector<16x16xi32>
    %28 = arith.cmpi slt, %23, %27 : vector<16x16xi32>
    %29 = arith.andi %26, %28 : vector<16x16xi1>
    %30 = vector.broadcast %c2_i32 : i32 to vector<16x16xi32>
    %31 = arith.select %29, %30, %23 : vector<16x16xi1>, vector<16x16xi32>
    %32 = arith.extui %26 : vector<16x16xi1> to vector<16x16xi32>
    %33 = arith.sitofp %32 : vector<16x16xi32> to vector<16x16xf32>
    %c3_i32 = arith.constant 3 : i32
    %cst_7 = arith.constant dense<0.000000e+00> : vector<16x16xf32>
    %34 = tpu.matmul %33, %18, %cst_7 {dimension_numbers = #tpu.dot_dimension_numbers<[1], [0], [0], [1], [0, 0, 1, 1], [], []>} : vector<16x16xf32>, vector<16x16xf32>, vector<16x16xf32> -> vector<16x16xf32>
    %cst_8 = arith.constant 0.000000e+00 : f32
    %35 = vector.broadcast %cst_8 : f32 to vector<16x16xf32>
    %36 = arith.cmpf ogt, %34, %35 : vector<16x16xf32>
    %c0_i32_9 = arith.constant 0 : i32
    %37 = vector.broadcast %c0_i32_9 : i32 to vector<16x16xi32>
    %38 = arith.cmpi slt, %31, %37 : vector<16x16xi32>
    %39 = arith.andi %36, %38 : vector<16x16xi1>
    %40 = vector.broadcast %c3_i32 : i32 to vector<16x16xi32>
    %41 = arith.select %39, %40, %31 : vector<16x16xi1>, vector<16x16xi32>
    %42 = arith.extui %36 : vector<16x16xi1> to vector<16x16xi32>
    %43 = arith.sitofp %42 : vector<16x16xi32> to vector<16x16xf32>
    %c4_i32 = arith.constant 4 : i32
    %cst_10 = arith.constant dense<0.000000e+00> : vector<16x16xf32>
    %44 = tpu.matmul %43, %18, %cst_10 {dimension_numbers = #tpu.dot_dimension_numbers<[1], [0], [0], [1], [0, 0, 1, 1], [], []>} : vector<16x16xf32>, vector<16x16xf32>, vector<16x16xf32> -> vector<16x16xf32>
    %cst_11 = arith.constant 0.000000e+00 : f32
    %45 = vector.broadcast %cst_11 : f32 to vector<16x16xf32>
    %46 = arith.cmpf ogt, %44, %45 : vector<16x16xf32>
    %c0_i32_12 = arith.constant 0 : i32
    %47 = vector.broadcast %c0_i32_12 : i32 to vector<16x16xi32>
    %48 = arith.cmpi slt, %41, %47 : vector<16x16xi32>
    %49 = arith.andi %46, %48 : vector<16x16xi1>
    %50 = vector.broadcast %c4_i32 : i32 to vector<16x16xi32>
    %51 = arith.select %49, %50, %41 : vector<16x16xi1>, vector<16x16xi32>
    %52 = arith.extui %46 : vector<16x16xi1> to vector<16x16xi32>
    %53 = arith.sitofp %52 : vector<16x16xi32> to vector<16x16xf32>
    %c5_i32 = arith.constant 5 : i32
    %cst_13 = arith.constant dense<0.000000e+00> : vector<16x16xf32>
    %54 = tpu.matmul %53, %18, %cst_13 {dimension_numbers = #tpu.dot_dimension_numbers<[1], [0], [0], [1], [0, 0, 1, 1], [], []>} : vector<16x16xf32>, vector<16x16xf32>, vector<16x16xf32> -> vector<16x16xf32>
    %cst_14 = arith.constant 0.000000e+00 : f32
    %55 = vector.broadcast %cst_14 : f32 to vector<16x16xf32>
    %56 = arith.cmpf ogt, %54, %55 : vector<16x16xf32>
    %c0_i32_15 = arith.constant 0 : i32
    %57 = vector.broadcast %c0_i32_15 : i32 to vector<16x16xi32>
    %58 = arith.cmpi slt, %51, %57 : vector<16x16xi32>
    %59 = arith.andi %56, %58 : vector<16x16xi1>
    %60 = vector.broadcast %c5_i32 : i32 to vector<16x16xi32>
    %61 = arith.select %59, %60, %51 : vector<16x16xi1>, vector<16x16xi32>
    %62 = arith.extui %56 : vector<16x16xi1> to vector<16x16xi32>
    %63 = arith.sitofp %62 : vector<16x16xi32> to vector<16x16xf32>
    %c6_i32 = arith.constant 6 : i32
    %cst_16 = arith.constant dense<0.000000e+00> : vector<16x16xf32>
    %64 = tpu.matmul %63, %18, %cst_16 {dimension_numbers = #tpu.dot_dimension_numbers<[1], [0], [0], [1], [0, 0, 1, 1], [], []>} : vector<16x16xf32>, vector<16x16xf32>, vector<16x16xf32> -> vector<16x16xf32>
    %cst_17 = arith.constant 0.000000e+00 : f32
    %65 = vector.broadcast %cst_17 : f32 to vector<16x16xf32>
    %66 = arith.cmpf ogt, %64, %65 : vector<16x16xf32>
    %c0_i32_18 = arith.constant 0 : i32
    %67 = vector.broadcast %c0_i32_18 : i32 to vector<16x16xi32>
    %68 = arith.cmpi slt, %61, %67 : vector<16x16xi32>
    %69 = arith.andi %66, %68 : vector<16x16xi1>
    %70 = vector.broadcast %c6_i32 : i32 to vector<16x16xi32>
    %71 = arith.select %69, %70, %61 : vector<16x16xi1>, vector<16x16xi32>
    %72 = arith.extui %66 : vector<16x16xi1> to vector<16x16xi32>
    %73 = arith.sitofp %72 : vector<16x16xi32> to vector<16x16xf32>
    %c7_i32 = arith.constant 7 : i32
    %cst_19 = arith.constant dense<0.000000e+00> : vector<16x16xf32>
    %74 = tpu.matmul %73, %18, %cst_19 {dimension_numbers = #tpu.dot_dimension_numbers<[1], [0], [0], [1], [0, 0, 1, 1], [], []>} : vector<16x16xf32>, vector<16x16xf32>, vector<16x16xf32> -> vector<16x16xf32>
    %cst_20 = arith.constant 0.000000e+00 : f32
    %75 = vector.broadcast %cst_20 : f32 to vector<16x16xf32>
    %76 = arith.cmpf ogt, %74, %75 : vector<16x16xf32>
    %c0_i32_21 = arith.constant 0 : i32
    %77 = vector.broadcast %c0_i32_21 : i32 to vector<16x16xi32>
    %78 = arith.cmpi slt, %71, %77 : vector<16x16xi32>
    %79 = arith.andi %76, %78 : vector<16x16xi1>
    %80 = vector.broadcast %c7_i32 : i32 to vector<16x16xi32>
    %81 = arith.select %79, %80, %71 : vector<16x16xi1>, vector<16x16xi32>
    %82 = arith.extui %76 : vector<16x16xi1> to vector<16x16xi32>
    %83 = arith.sitofp %82 : vector<16x16xi32> to vector<16x16xf32>
    %c8_i32 = arith.constant 8 : i32
    %cst_22 = arith.constant dense<0.000000e+00> : vector<16x16xf32>
    %84 = tpu.matmul %83, %18, %cst_22 {dimension_numbers = #tpu.dot_dimension_numbers<[1], [0], [0], [1], [0, 0, 1, 1], [], []>} : vector<16x16xf32>, vector<16x16xf32>, vector<16x16xf32> -> vector<16x16xf32>
    %cst_23 = arith.constant 0.000000e+00 : f32
    %85 = vector.broadcast %cst_23 : f32 to vector<16x16xf32>
    %86 = arith.cmpf ogt, %84, %85 : vector<16x16xf32>
    %c0_i32_24 = arith.constant 0 : i32
    %87 = vector.broadcast %c0_i32_24 : i32 to vector<16x16xi32>
    %88 = arith.cmpi slt, %81, %87 : vector<16x16xi32>
    %89 = arith.andi %86, %88 : vector<16x16xi1>
    %90 = vector.broadcast %c8_i32 : i32 to vector<16x16xi32>
    %91 = arith.select %89, %90, %81 : vector<16x16xi1>, vector<16x16xi32>
    %92 = arith.extui %86 : vector<16x16xi1> to vector<16x16xi32>
    %93 = arith.sitofp %92 : vector<16x16xi32> to vector<16x16xf32>
    %c9_i32 = arith.constant 9 : i32
    %cst_25 = arith.constant dense<0.000000e+00> : vector<16x16xf32>
    %94 = tpu.matmul %93, %18, %cst_25 {dimension_numbers = #tpu.dot_dimension_numbers<[1], [0], [0], [1], [0, 0, 1, 1], [], []>} : vector<16x16xf32>, vector<16x16xf32>, vector<16x16xf32> -> vector<16x16xf32>
    %cst_26 = arith.constant 0.000000e+00 : f32
    %95 = vector.broadcast %cst_26 : f32 to vector<16x16xf32>
    %96 = arith.cmpf ogt, %94, %95 : vector<16x16xf32>
    %c0_i32_27 = arith.constant 0 : i32
    %97 = vector.broadcast %c0_i32_27 : i32 to vector<16x16xi32>
    %98 = arith.cmpi slt, %91, %97 : vector<16x16xi32>
    %99 = arith.andi %96, %98 : vector<16x16xi1>
    %100 = vector.broadcast %c9_i32 : i32 to vector<16x16xi32>
    %101 = arith.select %99, %100, %91 : vector<16x16xi1>, vector<16x16xi32>
    %102 = arith.extui %96 : vector<16x16xi1> to vector<16x16xi32>
    %103 = arith.sitofp %102 : vector<16x16xi32> to vector<16x16xf32>
    %c10_i32 = arith.constant 10 : i32
    %cst_28 = arith.constant dense<0.000000e+00> : vector<16x16xf32>
    %104 = tpu.matmul %103, %18, %cst_28 {dimension_numbers = #tpu.dot_dimension_numbers<[1], [0], [0], [1], [0, 0, 1, 1], [], []>} : vector<16x16xf32>, vector<16x16xf32>, vector<16x16xf32> -> vector<16x16xf32>
    %cst_29 = arith.constant 0.000000e+00 : f32
    %105 = vector.broadcast %cst_29 : f32 to vector<16x16xf32>
    %106 = arith.cmpf ogt, %104, %105 : vector<16x16xf32>
    %c0_i32_30 = arith.constant 0 : i32
    %107 = vector.broadcast %c0_i32_30 : i32 to vector<16x16xi32>
    %108 = arith.cmpi slt, %101, %107 : vector<16x16xi32>
    %109 = arith.andi %106, %108 : vector<16x16xi1>
    %110 = vector.broadcast %c10_i32 : i32 to vector<16x16xi32>
    %111 = arith.select %109, %110, %101 : vector<16x16xi1>, vector<16x16xi32>
    %112 = arith.extui %106 : vector<16x16xi1> to vector<16x16xi32>
    %113 = arith.sitofp %112 : vector<16x16xi32> to vector<16x16xf32>
    %c11_i32 = arith.constant 11 : i32
    %cst_31 = arith.constant dense<0.000000e+00> : vector<16x16xf32>
    %114 = tpu.matmul %113, %18, %cst_31 {dimension_numbers = #tpu.dot_dimension_numbers<[1], [0], [0], [1], [0, 0, 1, 1], [], []>} : vector<16x16xf32>, vector<16x16xf32>, vector<16x16xf32> -> vector<16x16xf32>
    %cst_32 = arith.constant 0.000000e+00 : f32
    %115 = vector.broadcast %cst_32 : f32 to vector<16x16xf32>
    %116 = arith.cmpf ogt, %114, %115 : vector<16x16xf32>
    %c0_i32_33 = arith.constant 0 : i32
    %117 = vector.broadcast %c0_i32_33 : i32 to vector<16x16xi32>
    %118 = arith.cmpi slt, %111, %117 : vector<16x16xi32>
    %119 = arith.andi %116, %118 : vector<16x16xi1>
    %120 = vector.broadcast %c11_i32 : i32 to vector<16x16xi32>
    %121 = arith.select %119, %120, %111 : vector<16x16xi1>, vector<16x16xi32>
    %122 = arith.extui %116 : vector<16x16xi1> to vector<16x16xi32>
    %123 = arith.sitofp %122 : vector<16x16xi32> to vector<16x16xf32>
    %c12_i32 = arith.constant 12 : i32
    %cst_34 = arith.constant dense<0.000000e+00> : vector<16x16xf32>
    %124 = tpu.matmul %123, %18, %cst_34 {dimension_numbers = #tpu.dot_dimension_numbers<[1], [0], [0], [1], [0, 0, 1, 1], [], []>} : vector<16x16xf32>, vector<16x16xf32>, vector<16x16xf32> -> vector<16x16xf32>
    %cst_35 = arith.constant 0.000000e+00 : f32
    %125 = vector.broadcast %cst_35 : f32 to vector<16x16xf32>
    %126 = arith.cmpf ogt, %124, %125 : vector<16x16xf32>
    %c0_i32_36 = arith.constant 0 : i32
    %127 = vector.broadcast %c0_i32_36 : i32 to vector<16x16xi32>
    %128 = arith.cmpi slt, %121, %127 : vector<16x16xi32>
    %129 = arith.andi %126, %128 : vector<16x16xi1>
    %130 = vector.broadcast %c12_i32 : i32 to vector<16x16xi32>
    %131 = arith.select %129, %130, %121 : vector<16x16xi1>, vector<16x16xi32>
    %132 = arith.extui %126 : vector<16x16xi1> to vector<16x16xi32>
    %133 = arith.sitofp %132 : vector<16x16xi32> to vector<16x16xf32>
    %c13_i32 = arith.constant 13 : i32
    %cst_37 = arith.constant dense<0.000000e+00> : vector<16x16xf32>
    %134 = tpu.matmul %133, %18, %cst_37 {dimension_numbers = #tpu.dot_dimension_numbers<[1], [0], [0], [1], [0, 0, 1, 1], [], []>} : vector<16x16xf32>, vector<16x16xf32>, vector<16x16xf32> -> vector<16x16xf32>
    %cst_38 = arith.constant 0.000000e+00 : f32
    %135 = vector.broadcast %cst_38 : f32 to vector<16x16xf32>
    %136 = arith.cmpf ogt, %134, %135 : vector<16x16xf32>
    %c0_i32_39 = arith.constant 0 : i32
    %137 = vector.broadcast %c0_i32_39 : i32 to vector<16x16xi32>
    %138 = arith.cmpi slt, %131, %137 : vector<16x16xi32>
    %139 = arith.andi %136, %138 : vector<16x16xi1>
    %140 = vector.broadcast %c13_i32 : i32 to vector<16x16xi32>
    %141 = arith.select %139, %140, %131 : vector<16x16xi1>, vector<16x16xi32>
    %142 = arith.extui %136 : vector<16x16xi1> to vector<16x16xi32>
    %143 = arith.sitofp %142 : vector<16x16xi32> to vector<16x16xf32>
    %c14_i32 = arith.constant 14 : i32
    %cst_40 = arith.constant dense<0.000000e+00> : vector<16x16xf32>
    %144 = tpu.matmul %143, %18, %cst_40 {dimension_numbers = #tpu.dot_dimension_numbers<[1], [0], [0], [1], [0, 0, 1, 1], [], []>} : vector<16x16xf32>, vector<16x16xf32>, vector<16x16xf32> -> vector<16x16xf32>
    %cst_41 = arith.constant 0.000000e+00 : f32
    %145 = vector.broadcast %cst_41 : f32 to vector<16x16xf32>
    %146 = arith.cmpf ogt, %144, %145 : vector<16x16xf32>
    %c0_i32_42 = arith.constant 0 : i32
    %147 = vector.broadcast %c0_i32_42 : i32 to vector<16x16xi32>
    %148 = arith.cmpi slt, %141, %147 : vector<16x16xi32>
    %149 = arith.andi %146, %148 : vector<16x16xi1>
    %150 = vector.broadcast %c14_i32 : i32 to vector<16x16xi32>
    %151 = arith.select %149, %150, %141 : vector<16x16xi1>, vector<16x16xi32>
    %152 = arith.extui %146 : vector<16x16xi1> to vector<16x16xi32>
    %153 = arith.sitofp %152 : vector<16x16xi32> to vector<16x16xf32>
    %c15_i32 = arith.constant 15 : i32
    %cst_43 = arith.constant dense<0.000000e+00> : vector<16x16xf32>
    %154 = tpu.matmul %153, %18, %cst_43 {dimension_numbers = #tpu.dot_dimension_numbers<[1], [0], [0], [1], [0, 0, 1, 1], [], []>} : vector<16x16xf32>, vector<16x16xf32>, vector<16x16xf32> -> vector<16x16xf32>
    %cst_44 = arith.constant 0.000000e+00 : f32
    %155 = vector.broadcast %cst_44 : f32 to vector<16x16xf32>
    %156 = arith.cmpf ogt, %154, %155 : vector<16x16xf32>
    %c0_i32_45 = arith.constant 0 : i32
    %157 = vector.broadcast %c0_i32_45 : i32 to vector<16x16xi32>
    %158 = arith.cmpi slt, %151, %157 : vector<16x16xi32>
    %159 = arith.andi %156, %158 : vector<16x16xi1>
    %160 = vector.broadcast %c15_i32 : i32 to vector<16x16xi32>
    %161 = arith.select %159, %160, %151 : vector<16x16xi1>, vector<16x16xi32>
    %162 = arith.extui %156 : vector<16x16xi1> to vector<16x16xi32>
    %163 = arith.sitofp %162 : vector<16x16xi32> to vector<16x16xf32>
    %c14_i32_46 = arith.constant 14 : i32
    %c-1_i32_47 = arith.constant -1 : i32
    %164 = vector.broadcast %c-1_i32_47 : i32 to vector<16x16xi32>
    %165 = arith.select %11, %161, %164 : vector<16x16xi1>, vector<16x16xi32>
    %c-1_i32_48 = arith.constant -1 : i32
    %c2_i32_49 = arith.constant 2 : i32
    %166 = vector.broadcast %c-1_i32_48 : i32 to vector<16x16xi32>
    %167 = arith.maxsi %166, %165 : vector<16x16xi32>
    %168 = vector.broadcast %c2_i32_49 : i32 to vector<16x16xi32>
    %169 = arith.minsi %168, %167 : vector<16x16xi32>
    %c1_i32_50 = arith.constant 1 : i32
    %170 = vector.broadcast %c1_i32_50 : i32 to vector<16x16xi32>
    %171 = arith.addi %169, %170 : vector<16x16xi32>
    %c0_51 = arith.constant 0 : index
    %c0_52 = arith.constant 0 : index
    %172 = vector.load %arg3[%c0_51, %c0_52] : memref<4x128xf32, #tpu.memory_space<vmem>>, vector<4x128xf32>
    %cst_53 = arith.constant 0.000000e+00 : f32
    %173 = vector.broadcast %cst_53 : f32 to vector<16x16x128xf32>
    %c0_i32_54 = arith.constant 0 : i32
    %174 = vector.broadcast %c0_i32_54 : i32 to vector<16x16xi32>
    %175 = arith.cmpi eq, %171, %174 : vector<16x16xi32>
    %176 = arith.extui %175 : vector<16x16xi1> to vector<16x16xi32>
    %177 = arith.sitofp %176 : vector<16x16xi32> to vector<16x16xf32>
    %178 = vector.shape_cast %177 : vector<16x16xf32> to vector<16x16x1xf32>
    %179 = vector.extract_strided_slice %172 {offsets = [0, 0], sizes = [1, 128], strides = [1, 1]} : vector<4x128xf32> to vector<1x128xf32>
    %180 = vector.shape_cast %179 : vector<1x128xf32> to vector<128xf32>
    %181 = vector.shape_cast %180 : vector<128xf32> to vector<1x1x128xf32>
    %182 = vector.broadcast %178 : vector<16x16x1xf32> to vector<16x16x128xf32>
    %183 = vector.broadcast %181 : vector<1x1x128xf32> to vector<16x16x128xf32>
    %184 = arith.mulf %182, %183 : vector<16x16x128xf32>
    %185 = arith.addf %173, %184 : vector<16x16x128xf32>
    %c1_i32_55 = arith.constant 1 : i32
    %186 = vector.broadcast %c1_i32_55 : i32 to vector<16x16xi32>
    %187 = arith.cmpi eq, %171, %186 : vector<16x16xi32>
    %188 = arith.extui %187 : vector<16x16xi1> to vector<16x16xi32>
    %189 = arith.sitofp %188 : vector<16x16xi32> to vector<16x16xf32>
    %190 = vector.shape_cast %189 : vector<16x16xf32> to vector<16x16x1xf32>
    %191 = vector.extract_strided_slice %172 {offsets = [1, 0], sizes = [1, 128], strides = [1, 1]} : vector<4x128xf32> to vector<1x128xf32>
    %192 = vector.shape_cast %191 : vector<1x128xf32> to vector<128xf32>
    %193 = vector.shape_cast %192 : vector<128xf32> to vector<1x1x128xf32>
    %194 = vector.broadcast %190 : vector<16x16x1xf32> to vector<16x16x128xf32>
    %195 = vector.broadcast %193 : vector<1x1x128xf32> to vector<16x16x128xf32>
    %196 = arith.mulf %194, %195 : vector<16x16x128xf32>
    %197 = arith.addf %185, %196 : vector<16x16x128xf32>
    %c2_i32_56 = arith.constant 2 : i32
    %198 = vector.broadcast %c2_i32_56 : i32 to vector<16x16xi32>
    %199 = arith.cmpi eq, %171, %198 : vector<16x16xi32>
    %200 = arith.extui %199 : vector<16x16xi1> to vector<16x16xi32>
    %201 = arith.sitofp %200 : vector<16x16xi32> to vector<16x16xf32>
    %202 = vector.shape_cast %201 : vector<16x16xf32> to vector<16x16x1xf32>
    %203 = vector.extract_strided_slice %172 {offsets = [2, 0], sizes = [1, 128], strides = [1, 1]} : vector<4x128xf32> to vector<1x128xf32>
    %204 = vector.shape_cast %203 : vector<1x128xf32> to vector<128xf32>
    %205 = vector.shape_cast %204 : vector<128xf32> to vector<1x1x128xf32>
    %206 = vector.broadcast %202 : vector<16x16x1xf32> to vector<16x16x128xf32>
    %207 = vector.broadcast %205 : vector<1x1x128xf32> to vector<16x16x128xf32>
    %208 = arith.mulf %206, %207 : vector<16x16x128xf32>
    %209 = arith.addf %197, %208 : vector<16x16x128xf32>
    %c3_i32_57 = arith.constant 3 : i32
    %210 = vector.broadcast %c3_i32_57 : i32 to vector<16x16xi32>
    %211 = arith.cmpi eq, %171, %210 : vector<16x16xi32>
    %212 = arith.extui %211 : vector<16x16xi1> to vector<16x16xi32>
    %213 = arith.sitofp %212 : vector<16x16xi32> to vector<16x16xf32>
    %214 = vector.shape_cast %213 : vector<16x16xf32> to vector<16x16x1xf32>
    %215 = vector.extract_strided_slice %172 {offsets = [3, 0], sizes = [1, 128], strides = [1, 1]} : vector<4x128xf32> to vector<1x128xf32>
    %216 = vector.shape_cast %215 : vector<1x128xf32> to vector<128xf32>
    %217 = vector.shape_cast %216 : vector<128xf32> to vector<1x1x128xf32>
    %218 = vector.broadcast %214 : vector<16x16x1xf32> to vector<16x16x128xf32>
    %219 = vector.broadcast %217 : vector<1x1x128xf32> to vector<16x16x128xf32>
    %220 = arith.mulf %218, %219 : vector<16x16x128xf32>
    %221 = arith.addf %209, %220 : vector<16x16x128xf32>
    %c0_58 = arith.constant 0 : index
    %c0_59 = arith.constant 0 : index
    %c0_60 = arith.constant 0 : index
    %c0_61 = arith.constant 0 : index
    %222 = vector.load %arg4[%c0_58, %c0_59, %c0_60, %c0_61] : memref<1x16x16x128xf32, #tpu.memory_space<vmem>>, vector<1x16x16x128xf32>
    %223 = vector.shape_cast %222 : vector<1x16x16x128xf32> to vector<16x16x128xf32>
    %224 = vector.shape_cast %221 : vector<16x16x128xf32> to vector<1x16x16x128xf32>
    tpu.vector_store %arg4[%c0_58, %c0_59, %c0_60, %c0_61], %224 {strides = array<i32>} : memref<1x16x16x128xf32, #tpu.memory_space<vmem>>, vector<1x16x16x128xf32>,
    return
  }
  func.func @transform_0(%arg0: i32, %arg1: memref<2xi32, #tpu.memory_space<smem>>) -> (i32, i32, i32) {
    %c0_i32 = arith.constant 0 : i32
    %c0_i32_0 = arith.constant 0 : i32
    %c0_i32_1 = arith.constant 0 : i32
    return %arg0, %c0_i32, %c0_i32_0 : i32, i32, i32
  }
  func.func @transform_1(%arg0: i32, %arg1: memref<2xi32, #tpu.memory_space<smem>>) -> (i32, i32) {
    %c0_i32 = arith.constant 0 : i32
    %c0_i32_0 = arith.constant 0 : i32
    %c0_i32_1 = arith.constant 0 : i32
    return %c0_i32, %c0_i32_0 : i32, i32
  }
  func.func @transform_2(%arg0: i32, %arg1: memref<2xi32, #tpu.memory_space<smem>>) -> (i32, i32, i32, i32) {
    %c0_i32 = arith.constant 0 : i32
    %c0_i32_0 = arith.constant 0 : i32
    %c0_i32_1 = arith.constant 0 : i32
    %c0_i32_2 = arith.constant 0 : i32
    return %arg0, %c0_i32, %c0_i32_0, %c0_i32_1 : i32, i32, i32, i32
  }
}

</mosaic_0001>

<llo_original>
// kernel: tpu_custom_call.1
$region0: #{tpu_custom_call.1}
  #allocation0 [shape = 'u32[]', space=smem, size = 0x4, offset = 0x4, fixed_abs, tag = 'smem constant byte address 0x4 - core index']
  #allocation1 [shape = 'u32[144,128]{1,0:T(1,128)}', space=vmem, size = 0x12000, scoped, tag = 'internal scratch']
  #allocation2 [shape = 's32[1]{0}', space=sflag, size = 0x4, scoped, tag = 'scoped memory for tpu_custom_call.1']
  #allocation3 [shape = 'u8[512]{0}', space=smem, size = 0x200, scoped, tag = 'prefetched SMEM operand 0']
  %s0 = inlined_call_operand.hbm [shape: s32[2], index: 0, kind: input, shape index: {}]
  %s1 = inlined_call_operand.hbm [shape: f32[2,16,16], index: 1, kind: input, shape index: {}]
  %s2 = inlined_call_operand.hbm [shape: f32[4,128], index: 2, kind: input, shape index: {}]
  %s3 = inlined_call_operand.hbm [shape: f32[2,16,16,128], index: 3, kind: output, shape index: {}]
  %s4 = sld [smem:[#allocation0]]
  $region49: #{tpu_custom_call.1} parent=0
    _
  %s6 = ssub.s32 1, %s4
  %s7 = scalar_select 0, %s6, %s4
  %9 = dma.hbm_to_smem %s0, 16, [#allocation3], [#allocation2]
  %10 = dma.done [#allocation2], 16
  %11 = sfence
  $region1: #{tpu_custom_call.1} parent=0
    #allocation4 [shape = 'u8[16384]{0}', space=vmem, size = 0x4000, scoped, tag = 'input window, operand 1']
    #allocation5 [shape = 's32[2]{0}', space=sflag, size = 0x8, scoped, tag = 'scoped memory for tpu_custom_call.1']
    #allocation6 [shape = 's32[2]{0}', space=sflag, size = 0x8, scoped, tag = 'scoped memory for tpu_custom_call.1']
    #allocation7 [shape = 'u8[2048]{0}', space=vmem, size = 0x800, scoped, tag = 'input window, operand 2, single buffered']
    #allocation8 [shape = 's32[1]{0}', space=sflag, size = 0x4, scoped, tag = 'scoped memory for tpu_custom_call.1']
    #allocation9 [shape = 'u8[262144]{0}', space=vmem, size = 0x40000, scoped, tag = 'output window, operand 0']
    %12 = vsyncpa [#allocation5], 0
    %s13 = scalar_lea.sflag [#allocation5], 1
    %14 = vsyncpa %s13, 0
    %15 = vsyncpa [#allocation8], 0
    %16 = vsyncpa [#allocation6], 0
    %s17 = scalar_lea.sflag [#allocation6], 1
    %18 = vsyncpa %s17, 0
    loop: start=0, step=1, limit=4
    $region2: #{tpu_custom_call.1} parent=1 // loop_pre_header
      _
    $region3: #{tpu_custom_call.1} parent=1 // loop_header
      %s20 = sphi 0, %s24
      %p21 = scmp.ge.s32.totalorder %s20, 4
      %s30 = sphi 0, %s32
      %s33 = sphi 0, %s30
      %s34 = sphi 0, %s33
      %s50 = sphi 0, %s34
      %s54 = sphi 0, %s54
      %s56 = sphi 0, %s54
      %s57 = sphi 0, %s56
      %s71 = sphi 0, %s57
      %s77 = sphi 0, %s79
      %s80 = sphi 0, %s77
      %s81 = sphi 0, %s80
      %s97 = sphi 0, %s81
    $region4: #{tpu_custom_call.1} parent=1 // loop_header_branch
      %23 = sbr.rel (%p21) target = $region8
    $region5: #{tpu_custom_call.1} parent=1 // loop_body
      %s25 = ssub.s32 %s20, 1
      %s26 = ssub.s32 %s20, 2
      %s27 = sadd.s32 %s20, 1
      %s28 = ssub.s32 %s20, %s27
      %p29 = scmp.eq.s32.totalorder %s28, 0
      %s31 = sadd.s32 %s30, 1
      %s32 = scalar_select %p29, %s30, %s31
      %p35 = pneg %p29
      %p36 = scmp.eq.s32.totalorder %s20, 1
      %p37 = por %p35, %p36
      %p38 = scmp.ne.s32.totalorder %s30, %s33
      %p39 = scmp.eq.s32.totalorder %s20, 0
      %p40 = por %p38, %p39
      %p41 = scmp.ne.s32.totalorder %s30, %s33
      %p42 = scmp.eq.s32.totalorder %s25, 1
      %p43 = por %p41, %p42
      %p44 = scmp.ne.s32.totalorder %s33, %s34
      %p45 = scmp.eq.s32.totalorder %s25, 0
      %p46 = por %p44, %p45
      %p47 = scmp.ne.s32.totalorder %s33, %s34
      %p48 = scmp.eq.s32.totalorder %s26, 1
      %p49 = por %p47, %p48
      %p51 = scmp.ne.s32.totalorder %s34, %s50
      %p52 = scmp.eq.s32.totalorder %s26, 0
      %p53 = por %p51, %p52
      %s55 = sadd.s32 %s54, 1
      %p58 = scmp.eq.s32.totalorder %s20, 1
      %p59 = scmp.ne.s32.totalorder %s54, %s56
      %p60 = scmp.eq.s32.totalorder %s20, 0
      %p61 = por %p59, %p60
      %p62 = scmp.ne.s32.totalorder %s54, %s56
      %p63 = scmp.eq.s32.totalorder %s25, 1
      %p64 = por %p62, %p63
      %p65 = scmp.ne.s32.totalorder %s56, %s57
      %p66 = scmp.eq.s32.totalorder %s25, 0
      %p67 = por %p65, %p66
      %p68 = scmp.ne.s32.totalorder %s56, %s57
      %p69 = scmp.eq.s32.totalorder %s26, 1
      %p70 = por %p68, %p69
      %p72 = scmp.ne.s32.totalorder %s57, %s71
      %p73 = scmp.eq.s32.totalorder %s26, 0
      %p74 = por %p72, %p73
      %s75 = ssub.s32 %s20, %s27
      %p76 = scmp.eq.s32.totalorder %s75, 0
      %s78 = sadd.s32 %s77, 1
      %s79 = scalar_select %p76, %s77, %s78
      %p82 = pneg %p76
      %p83 = scmp.eq.s32.totalorder %s20, 1
      %p84 = por %p82, %p83
      %p85 = scmp.ne.s32.totalorder %s77, %s80
      %p86 = scmp.eq.s32.totalorder %s20, 0
      %p87 = por %p85, %p86
      %p88 = scmp.ne.s32.totalorder %s77, %s80
      %p89 = scmp.eq.s32.totalorder %s25, 1
      %p90 = por %p88, %p89
      %p91 = scmp.ne.s32.totalorder %s80, %s81
      %p92 = scmp.eq.s32.totalorder %s25, 0
      %p93 = por %p91, %p92
      %p94 = scmp.ne.s32.totalorder %s80, %s81
      %p95 = scmp.eq.s32.totalorder %s26, 1
      %p96 = por %p94, %p95
      %p98 = scmp.ne.s32.totalorder %s81, %s97
      %p99 = scmp.eq.s32.totalorder %s26, 0
      %p100 = por %p98, %p99
      %p101 = scmp.le.s32.totalorder 1, %s20
      %p102 = scmp.lt.s32.totalorder %s20, 3
      %p103 = pnand %p101, %p102
      %p104 = pneg %p103
      // Predicated region
      $region9: #{tpu_custom_call.1} parent=5 // pred_check
        _
      $region10: #{tpu_custom_call.1} parent=5 // pred_check_branch
        %106 = sbr.rel (%p103) target = $region12
      $region11: #{tpu_custom_call.1} parent=5 // pred_region
        %s107 = ssub.s32 %s20, 1
        // Predicated region
        $region13: #{tpu_custom_call.1} parent=11 // pred_check
          %p108 = pneg %p67
        $region14: #{tpu_custom_call.1} parent=11 // pred_check_branch
          %110 = sbr.rel (%p108) target = $region16
        $region15: #{tpu_custom_call.1} parent=11 // pred_region
          %s112 = ssub.s32 64, 64
          %113 = vsyncadd [#allocation8], %s112
          %s115 = sshll.u32 [#allocation7], 4
          %s116 = int_to_ptr.vmem [resolvable:$true] %s115
          %118 = dma.hbm_to_vmem [thread:$0]  %s2, 64, %s116, [#allocation8]
        $region16: #{tpu_custom_call.1} parent=11 // pred_fallthru
          _
      $region12: #{tpu_custom_call.1} parent=5 // pred_fallthru
        _
      %p119 = scmp.lt.s32.totalorder %s20, 2
      // Predicated region
      $region17: #{tpu_custom_call.1} parent=5 // pred_check
        %p120 = pneg %p119
      $region18: #{tpu_custom_call.1} parent=5 // pred_check_branch
        %122 = sbr.rel (%p120) target = $region20
      $region19: #{tpu_custom_call.1} parent=5 // pred_region
        // Predicated region
        $region21: #{tpu_custom_call.1} parent=19 // pred_check
          %p123 = pneg %p40
        $region22: #{tpu_custom_call.1} parent=19 // pred_check_branch
          %125 = sbr.rel (%p123) target = $region24
        $region23: #{tpu_custom_call.1} parent=19 // pred_region
          %s126 = sand.u32 %s30, 1
          %s127 = scalar_lea.sflag [#allocation5], %s126
          %s128 = sand.u32 %s30, 1
          %s129 = smul.addr %s128, 16
          %s130 = scalar_lea.vmem [#allocation4], %s129
          %s132 = ssub.s32 256, 256
          %133 = vsyncadd %s127, %s132
          %s134 = smul.addr %s20, 2
          %s135 = smul.addr %s134, 128
          %s136 = scalar_lea.hbm %s1, %s135
          %s137 = sshll.u32 %s130, 4
          %s138 = int_to_ptr.vmem [resolvable:$true] %s137
          %143 = dma.hbm_to_vmem [thread:$0]  %s136, 256, %s138, %s127, 128, 128, 8
        $region24: #{tpu_custom_call.1} parent=19 // pred_fallthru
          _
      $region20: #{tpu_custom_call.1} parent=5 // pred_fallthru
        _
      %p144 = scmp.le.s32.totalorder 1, %s20
      %p145 = scmp.lt.s32.totalorder %s20, 3
      %p146 = pnand %p144, %p145
      %p147 = pneg %p146
      // Predicated region
      $region25: #{tpu_custom_call.1} parent=5 // pred_check
        _
      $region26: #{tpu_custom_call.1} parent=5 // pred_check_branch
        %149 = sbr.rel (%p146) target = $region28
      $region27: #{tpu_custom_call.1} parent=5 // pred_region
        %s150 = ssub.s32 %s20, 1
        %s151 = sand.u32 %s33, 1
        %s152 = scalar_lea.sflag [#allocation5], %s151
        %s153 = sand.u32 %s33, 1
        %s154 = smul.addr %s153, 16
        %s155 = scalar_lea.vmem [#allocation4], %s154
        // Predicated region
        $region29: #{tpu_custom_call.1} parent=27 // pred_check
          %p156 = pneg %p46
        $region30: #{tpu_custom_call.1} parent=27 // pred_check_branch
          %158 = sbr.rel (%p156) target = $region32
        $region31: #{tpu_custom_call.1} parent=27 // pred_region
          %159 = dma.done %s152, 256
        $region32: #{tpu_custom_call.1} parent=27 // pred_fallthru
          _
        // Predicated region
        $region33: #{tpu_custom_call.1} parent=27 // pred_check
          %p160 = pneg %p67
        $region34: #{tpu_custom_call.1} parent=27 // pred_check_branch
          %162 = sbr.rel (%p160) target = $region36
        $region35: #{tpu_custom_call.1} parent=27 // pred_region
          %163 = dma.done [#allocation8], 64
        $region36: #{tpu_custom_call.1} parent=27 // pred_fallthru
          _
        %s164 = sand.u32 %s33, 1
        %s165 = scalar_lea.sflag [#allocation5], %s164
        %s166 = sand.u32 %s33, 1
        %s167 = smul.addr %s166, 16
        %s168 = scalar_lea.vmem [#allocation4], %s167
        %p169 = pneg %p46
        %p170 = pneg %p43
        %p171 = pneg %p67
        %p172 = pneg %p64
        %p173 = pneg %p93
        %p174 = pneg %p90
        %s175 = sand.u32 %s80, 1
        %s176 = scalar_lea.sflag [#allocation6], %s175
        %s177 = sand.u32 %s80, 1
        %s178 = smul.addr %s177, 256
        %s179 = scalar_lea.vmem [#allocation9], %s178
        %s180 = sld [smem:[#allocation3 + %s25]]
        %v181 = vld [vmem:[%s155] sm:$0xff]
        %v182 = vld [vmem:[%s155 + $0x8] sm:$0xff]
        %v183 = vlaneseq
        %v184 = vshrl.u32 %v183, 7
        %v185 = vadd.s32 %v184, 8
        %v186 = vlaneseq
        %v187 = vand.u32 %v186, 127
        %vm188 = vcmp.eq.s32.totalorder %v184, %v187
        %vm189 = vcmp.eq.s32.totalorder %v185, %v187
        %v190 = vstv %s180
        %vm191 = vcmp.lt.s32.totalorder %v184, %v190
        %vm192 = vcmp.lt.s32.totalorder %v185, %v190
        %vm193 = vcmp.lt.s32.totalorder %v187, %v190
        %vm194 = vmand %vm191, %vm193
        %vm195 = vmand %vm192, %vm193
        %vm196 = vcmp.gt.f32.partialorder %v181, 0.0
        %vm197 = vcmp.gt.f32.partialorder %v182, 0.0
        %vm198 = vmand %vm196, %vm194
        %vm199 = vmand %vm197, %vm195
        %vm200 = vmor %vm198, %vm188
        %vm201 = vmor %vm199, %vm189
        %v202 = vsel %vm200, 1.0, 0.0
        %v203 = vsel %vm201, 1.0, 0.0
        %v204 = vsel %vm198, 1, 4294967295
        %v205 = vsel %vm199, 1, 4294967295
        %v206 = vsel %vm188, 0, %v204
        %v207 = vsel %vm189, 0, %v205
        %vm208 = vcmask 130048
        %v210 = vsel %vm208, %v202, 0
        %v213 = vsel %vm208, %v203, 0
        %215 = vmatprep.subr.mxu0 0.0
        %216 = vmatpush1.msra.mxu0 0.0
        %217 = vmatprep.subr.mxu0 0.0
        %218 = vmatpush1.msra.mxu0 0.0
        %219 = vmatprep.subr.mxu0 0.0
        %220 = vmatpush1.msra.mxu0 0.0
        %221 = vmatprep.subr.mxu0 0.0
        %222 = vmatpush1.msra.mxu0 0.0
        %223 = vmatprep.subr.mxu0 0.0
        %224 = vmatpush1.msra.mxu0 0.0
        %225 = vmatprep.subr.mxu0 0.0
        %226 = vmatpush1.msra.mxu0 0.0
        %227 = vmatprep.subr.mxu0 0.0
        %228 = vmatpush1.msra.mxu0 0.0
        %229 = vmatprep.subr.mxu0 0.0
        %230 = vmatpush1.msra.mxu0 0.0
        %231 = vmatprep.subr.mxu0 0.0
        %232 = vmatpush1.msra.mxu0 0.0
        %233 = vmatprep.subr.mxu0 0.0
        %234 = vmatpush1.msra.mxu0 0.0
        %235 = vmatprep.subr.mxu0 0.0
        %236 = vmatpush1.msra.mxu0 0.0
        %237 = vmatprep.subr.mxu0 0.0
        %238 = vmatpush1.msra.mxu0 0.0
        %239 = vmatprep.subr.mxu0 0.0
        %240 = vmatpush1.msra.mxu0 0.0
        %241 = vmatprep.subr.mxu0 0.0
        %242 = vmatpush1.msra.mxu0 0.0
        %243 = vmatprep.subr.mxu0 0.0
        %244 = vmatpush1.msra.mxu0 %v203
        %245 = vmatprep.subr.mxu0 0.0
        %246 = vmatpush1.msra.mxu0 %v202
        %247 = vmatprep.subr.mxu0 0.0
        %248 = vmatpush2.msra.mxu0 0.0
        %249 = vmatprep.subr.mxu0 0.0
        %250 = vmatpush2.msra.mxu0 0.0
        %251 = vmatprep.subr.mxu0 0.0
        %252 = vmatpush2.msra.mxu0 0.0
        %253 = vmatprep.subr.mxu0 0.0
        %254 = vmatpush2.msra.mxu0 0.0
        %255 = vmatprep.subr.mxu0 0.0
        %256 = vmatpush2.msra.mxu0 0.0
        %257 = vmatprep.subr.mxu0 0.0
        %258 = vmatpush2.msra.mxu0 0.0
        %259 = vmatprep.subr.mxu0 0.0
        %260 = vmatpush2.msra.mxu0 0.0
        %261 = vmatprep.subr.mxu0 0.0
        %262 = vmatpush2.msra.mxu0 0.0
        %263 = vmatprep.subr.mxu0 0.0
        %264 = vmatpush2.msra.mxu0 0.0
        %265 = vmatprep.subr.mxu0 0.0
        %266 = vmatpush2.msra.mxu0 0.0
        %267 = vmatprep.subr.mxu0 0.0
        %268 = vmatpush2.msra.mxu0 0.0
        %269 = vmatprep.subr.mxu0 0.0
        %270 = vmatpush2.msra.mxu0 0.0
        %271 = vmatprep.subr.mxu0 0.0
        %272 = vmatpush2.msra.mxu0 0.0
        %273 = vmatprep.subr.mxu0 0.0
        %274 = vmatpush2.msra.mxu0 0.0
        %275 = vmatprep.subr.mxu0 0.0
        %276 = vmatpush2.msra.mxu0 0.0
        %277 = vmatprep.subr.mxu0 0.0
        %278 = vmatpush2.msra.mxu0 0.0
        %279 = vmatprep.mubr.f32.mxu0 0.0
        %280 = vmatmul.mubr.f32.gmra.mxu0 %v210
        %v281 = vpop.f32.mrf.mxu0
        %v282 = vadd.f32 0.0, %v281
        %v283 = vpop.f32.mrf.mxu0
        %284 = vmatprep.mubr.f32.mxu0 0.0
        %285 = vmatmul.mubr.f32.gmra.mxu0 %v213
        %v286 = vpop.f32.mrf.mxu0
        %v287 = vadd.f32 0.0, %v286
        %v288 = vpop.f32.mrf.mxu0
        %289 = vdwg.mxu0
        %vm290 = vcmp.gt.f32.partialorder %v282, 0.0
        %vm291 = vcmp.gt.f32.partialorder %v287, 0.0
        %vm292 = vcmp.lt.s32.totalorder %v206, 0
        %vm293 = vcmp.lt.s32.totalorder %v207, 0
        %vm294 = vmand %vm290, %vm292
        %vm295 = vmand %vm291, %vm293
        %v296 = vsel %vm294, 2, %v206
        %v297 = vsel %vm295, 2, %v207
        %v298 = vsel %vm290, 1, 0
        %v299 = vsel %vm291, 1, 0
        %v300 = vcvt.s32.f32 %v298
        %v301 = vcvt.s32.f32 %v299
        %v303 = vsel %vm208, %v300, 0
        %v306 = vsel %vm208, %v301, 0
        %308 = vmatprep.subr.mxu0 0.0
        %309 = vmatpush1.msra.mxu0 0.0
        %310 = vmatprep.subr.mxu0 0.0
        %311 = vmatpush1.msra.mxu0 0.0
        %312 = vmatprep.subr.mxu0 0.0
        %313 = vmatpush1.msra.mxu0 0.0
        %314 = vmatprep.subr.mxu0 0.0
        %315 = vmatpush1.msra.mxu0 0.0
        %316 = vmatprep.subr.mxu0 0.0
        %317 = vmatpush1.msra.mxu0 0.0
        %318 = vmatprep.subr.mxu0 0.0
        %319 = vmatpush1.msra.mxu0 0.0
        %320 = vmatprep.subr.mxu0 0.0
        %321 = vmatpush1.msra.mxu0 0.0
        %322 = vmatprep.subr.mxu0 0.0
        %323 = vmatpush1.msra.mxu0 0.0
        %324 = vmatprep.subr.mxu0 0.0
        %325 = vmatpush1.msra.mxu0 0.0
        %326 = vmatprep.subr.mxu0 0.0
        %327 = vmatpush1.msra.mxu0 0.0
        %328 = vmatprep.subr.mxu0 0.0
        %329 = vmatpush1.msra.mxu0 0.0
        %330 = vmatprep.subr.mxu0 0.0
        %331 = vmatpush1.msra.mxu0 0.0
        %332 = vmatprep.subr.mxu0 0.0
        %333 = vmatpush1.msra.mxu0 0.0
        %334 = vmatprep.subr.mxu0 0.0
        %335 = vmatpush1.msra.mxu0 0.0
        %336 = vmatprep.subr.mxu0 0.0
        %337 = vmatpush1.msra.mxu0 %v203
        %338 = vmatprep.subr.mxu0 0.0
        %339 = vmatpush1.msra.mxu0 %v202
        %340 = vmatprep.subr.mxu0 0.0
        %341 = vmatpush2.msra.mxu0 0.0
        %342 = vmatprep.subr.mxu0 0.0
        %343 = vmatpush2.msra.mxu0 0.0
        %344 = vmatprep.subr.mxu0 0.0
        %345 = vmatpush2.msra.mxu0 0.0
        %346 = vmatprep.subr.mxu0 0.0
        %347 = vmatpush2.msra.mxu0 0.0
        %348 = vmatprep.subr.mxu0 0.0
        %349 = vmatpush2.msra.mxu0 0.0
        %350 = vmatprep.subr.mxu0 0.0
        %351 = vmatpush2.msra.mxu0 0.0
        %352 = vmatprep.subr.mxu0 0.0
        %353 = vmatpush2.msra.mxu0 0.0
        %354 = vmatprep.subr.mxu0 0.0
        %355 = vmatpush2.msra.mxu0 0.0
        %356 = vmatprep.subr.mxu0 0.0
        %357 = vmatpush2.msra.mxu0 0.0
        %358 = vmatprep.subr.mxu0 0.0
        %359 = vmatpush2.msra.mxu0 0.0
        %360 = vmatprep.subr.mxu0 0.0
        %361 = vmatpush2.msra.mxu0 0.0
        %362 = vmatprep.subr.mxu0 0.0
        %363 = vmatpush2.msra.mxu0 0.0
        %364 = vmatprep.subr.mxu0 0.0
        %365 = vmatpush2.msra.mxu0 0.0
        %366 = vmatprep.subr.mxu0 0.0
        %367 = vmatpush2.msra.mxu0 0.0
        %368 = vmatprep.subr.mxu0 0.0
        %369 = vmatpush2.msra.mxu0 0.0
        %370 = vmatprep.subr.mxu0 0.0
        %371 = vmatpush2.msra.mxu0 0.0
        %372 = vmatprep.mubr.f32.mxu0 0.0
        %373 = vmatmul.mubr.f32.gmra.mxu0 %v303
        %v374 = vpop.f32.mrf.mxu0
        %v375 = vadd.f32 0.0, %v374
        %v376 = vpop.f32.mrf.mxu0
        %377 = vmatprep.mubr.f32.mxu0 0.0
        %378 = vmatmul.mubr.f32.gmra.mxu0 %v306
        %v379 = vpop.f32.mrf.mxu0
        %v380 = vadd.f32 0.0, %v379
        %v381 = vpop.f32.mrf.mxu0
        %382 = vdwg.mxu0
        %vm383 = vcmp.gt.f32.partialorder %v375, 0.0
        %vm384 = vcmp.gt.f32.partialorder %v380, 0.0
        %vm385 = vcmp.lt.s32.totalorder %v296, 0
        %vm386 = vcmp.lt.s32.totalorder %v297, 0
        %vm387 = vmand %vm383, %vm385
        %vm388 = vmand %vm384, %vm386
        %v389 = vsel %vm387, 3, %v296
        %v390 = vsel %vm388, 3, %v297
        %v391 = vsel %vm383, 1, 0
        %v392 = vsel %vm384, 1, 0
        %v393 = vcvt.s32.f32 %v391
        %v394 = vcvt.s32.f32 %v392
        %v396 = vsel %vm208, %v393, 0
        %v399 = vsel %vm208, %v394, 0
        %401 = vmatprep.subr.mxu0 0.0
        %402 = vmatpush1.msra.mxu0 0.0
        %403 = vmatprep.subr.mxu0 0.0
        %404 = vmatpush1.msra.mxu0 0.0
        %405 = vmatprep.subr.mxu0 0.0
        %406 = vmatpush1.msra.mxu0 0.0
        %407 = vmatprep.subr.mxu0 0.0
        %408 = vmatpush1.msra.mxu0 0.0
        %409 = vmatprep.subr.mxu0 0.0
        %410 = vmatpush1.msra.mxu0 0.0
        %411 = vmatprep.subr.mxu0 0.0
        %412 = vmatpush1.msra.mxu0 0.0
        %413 = vmatprep.subr.mxu0 0.0
        %414 = vmatpush1.msra.mxu0 0.0
        %415 = vmatprep.subr.mxu0 0.0
        %416 = vmatpush1.msra.mxu0 0.0
        %417 = vmatprep.subr.mxu0 0.0
        %418 = vmatpush1.msra.mxu0 0.0
        %419 = vmatprep.subr.mxu0 0.0
        %420 = vmatpush1.msra.mxu0 0.0
        %421 = vmatprep.subr.mxu0 0.0
        %422 = vmatpush1.msra.mxu0 0.0
        %423 = vmatprep.subr.mxu0 0.0
        %424 = vmatpush1.msra.mxu0 0.0
        %425 = vmatprep.subr.mxu0 0.0
        %426 = vmatpush1.msra.mxu0 0.0
        %427 = vmatprep.subr.mxu0 0.0
        %428 = vmatpush1.msra.mxu0 0.0
        %429 = vmatprep.subr.mxu0 0.0
        %430 = vmatpush1.msra.mxu0 %v203
        %431 = vmatprep.subr.mxu0 0.0
        %432 = vmatpush1.msra.mxu0 %v202
        %433 = vmatprep.subr.mxu0 0.0
        %434 = vmatpush2.msra.mxu0 0.0
        %435 = vmatprep.subr.mxu0 0.0
        %436 = vmatpush2.msra.mxu0 0.0
        %437 = vmatprep.subr.mxu0 0.0
        %438 = vmatpush2.msra.mxu0 0.0
        %439 = vmatprep.subr.mxu0 0.0
        %440 = vmatpush2.msra.mxu0 0.0
        %441 = vmatprep.subr.mxu0 0.0
        %442 = vmatpush2.msra.mxu0 0.0
        %443 = vmatprep.subr.mxu0 0.0
        %444 = vmatpush2.msra.mxu0 0.0
        %445 = vmatprep.subr.mxu0 0.0
        %446 = vmatpush2.msra.mxu0 0.0
        %447 = vmatprep.subr.mxu0 0.0
        %448 = vmatpush2.msra.mxu0 0.0
        %449 = vmatprep.subr.mxu0 0.0
        %450 = vmatpush2.msra.mxu0 0.0
        %451 = vmatprep.subr.mxu0 0.0
        %452 = vmatpush2.msra.mxu0 0.0
        %453 = vmatprep.subr.mxu0 0.0
        %454 = vmatpush2.msra.mxu0 0.0
        %455 = vmatprep.subr.mxu0 0.0
        %456 = vmatpush2.msra.mxu0 0.0
        %457 = vmatprep.subr.mxu0 0.0
        %458 = vmatpush2.msra.mxu0 0.0
        %459 = vmatprep.subr.mxu0 0.0
        %460 = vmatpush2.msra.mxu0 0.0
        %461 = vmatprep.subr.mxu0 0.0
        %462 = vmatpush2.msra.mxu0 0.0
        %463 = vmatprep.subr.mxu0 0.0
        %464 = vmatpush2.msra.mxu0 0.0
        %465 = vmatprep.mubr.f32.mxu0 0.0
        %466 = vmatmul.mubr.f32.gmra.mxu0 %v396
        %v467 = vpop.f32.mrf.mxu0
        %v468 = vadd.f32 0.0, %v467
        %v469 = vpop.f32.mrf.mxu0
        %470 = vmatprep.mubr.f32.mxu0 0.0
        %471 = vmatmul.mubr.f32.gmra.mxu0 %v399
        %v472 = vpop.f32.mrf.mxu0
        %v473 = vadd.f32 0.0, %v472
        %v474 = vpop.f32.mrf.mxu0
        %475 = vdwg.mxu0
        %vm476 = vcmp.gt.f32.partialorder %v468, 0.0
        %vm477 = vcmp.gt.f32.partialorder %v473, 0.0
        %vm478 = vcmp.lt.s32.totalorder %v389, 0
        %vm479 = vcmp.lt.s32.totalorder %v390, 0
        %vm480 = vmand %vm476, %vm478
        %vm481 = vmand %vm477, %vm479
        %v482 = vsel %vm480, 4, %v389
        %v483 = vsel %vm481, 4, %v390
        %v484 = vsel %vm476, 1, 0
        %v485 = vsel %vm477, 1, 0
        %v486 = vcvt.s32.f32 %v484
        %v487 = vcvt.s32.f32 %v485
        %v489 = vsel %vm208, %v486, 0
        %v492 = vsel %vm208, %v487, 0
        %494 = vmatprep.subr.mxu0 0.0
        %495 = vmatpush1.msra.mxu0 0.0
        %496 = vmatprep.subr.mxu0 0.0
        %497 = vmatpush1.msra.mxu0 0.0
        %498 = vmatprep.subr.mxu0 0.0
        %499 = vmatpush1.msra.mxu0 0.0
        %500 = vmatprep.subr.mxu0 0.0
        %501 = vmatpush1.msra.mxu0 0.0
        %502 = vmatprep.subr.mxu0 0.0
        %503 = vmatpush1.msra.mxu0 0.0
        %504 = vmatprep.subr.mxu0 0.0
        %505 = vmatpush1.msra.mxu0 0.0
        %506 = vmatprep.subr.mxu0 0.0
        %507 = vmatpush1.msra.mxu0 0.0
        %508 = vmatprep.subr.mxu0 0.0
        %509 = vmatpush1.msra.mxu0 0.0
        %510 = vmatprep.subr.mxu0 0.0
        %511 = vmatpush1.msra.mxu0 0.0
        %512 = vmatprep.subr.mxu0 0.0
        %513 = vmatpush1.msra.mxu0 0.0
        %514 = vmatprep.subr.mxu0 0.0
        %515 = vmatpush1.msra.mxu0 0.0
        %516 = vmatprep.subr.mxu0 0.0
        %517 = vmatpush1.msra.mxu0 0.0
        %518 = vmatprep.subr.mxu0 0.0
        %519 = vmatpush1.msra.mxu0 0.0
        %520 = vmatprep.subr.mxu0 0.0
        %521 = vmatpush1.msra.mxu0 0.0
        %522 = vmatprep.subr.mxu0 0.0
        %523 = vmatpush1.msra.mxu0 %v203
        %524 = vmatprep.subr.mxu0 0.0
        %525 = vmatpush1.msra.mxu0 %v202
        %526 = vmatprep.subr.mxu0 0.0
        %527 = vmatpush2.msra.mxu0 0.0
        %528 = vmatprep.subr.mxu0 0.0
        %529 = vmatpush2.msra.mxu0 0.0
        %530 = vmatprep.subr.mxu0 0.0
        %531 = vmatpush2.msra.mxu0 0.0
        %532 = vmatprep.subr.mxu0 0.0
        %533 = vmatpush2.msra.mxu0 0.0
        %534 = vmatprep.subr.mxu0 0.0
        %535 = vmatpush2.msra.mxu0 0.0
        %536 = vmatprep.subr.mxu0 0.0
        %537 = vmatpush2.msra.mxu0 0.0
        %538 = vmatprep.subr.mxu0 0.0
        %539 = vmatpush2.msra.mxu0 0.0
        %540 = vmatprep.subr.mxu0 0.0
        %541 = vmatpush2.msra.mxu0 0.0
        %542 = vmatprep.subr.mxu0 0.0
        %543 = vmatpush2.msra.mxu0 0.0
        %544 = vmatprep.subr.mxu0 0.0
        %545 = vmatpush2.msra.mxu0 0.0
        %546 = vmatprep.subr.mxu0 0.0
        %547 = vmatpush2.msra.mxu0 0.0
        %548 = vmatprep.subr.mxu0 0.0
        %549 = vmatpush2.msra.mxu0 0.0
        %550 = vmatprep.subr.mxu0 0.0
        %551 = vmatpush2.msra.mxu0 0.0
        %552 = vmatprep.subr.mxu0 0.0
        %553 = vmatpush2.msra.mxu0 0.0
        %554 = vmatprep.subr.mxu0 0.0
        %555 = vmatpush2.msra.mxu0 0.0
        %556 = vmatprep.subr.mxu0 0.0
        %557 = vmatpush2.msra.mxu0 0.0
        %558 = vmatprep.mubr.f32.mxu0 0.0
        %559 = vmatmul.mubr.f32.gmra.mxu0 %v489
        %v560 = vpop.f32.mrf.mxu0
        %v561 = vadd.f32 0.0, %v560
        %v562 = vpop.f32.mrf.mxu0
        %563 = vmatprep.mubr.f32.mxu0 0.0
        %564 = vmatmul.mubr.f32.gmra.mxu0 %v492
        %v565 = vpop.f32.mrf.mxu0
        %v566 = vadd.f32 0.0, %v565
        %v567 = vpop.f32.mrf.mxu0
        %568 = vdwg.mxu0
        %vm569 = vcmp.gt.f32.partialorder %v561, 0.0
        %vm570 = vcmp.gt.f32.partialorder %v566, 0.0
        %vm571 = vcmp.lt.s32.totalorder %v482, 0
        %vm572 = vcmp.lt.s32.totalorder %v483, 0
        %vm573 = vmand %vm569, %vm571
        %vm574 = vmand %vm570, %vm572
        %v575 = vsel %vm573, 5, %v482
        %v576 = vsel %vm574, 5, %v483
        %v577 = vsel %vm569, 1, 0
        %v578 = vsel %vm570, 1, 0
        %v579 = vcvt.s32.f32 %v577
        %v580 = vcvt.s32.f32 %v578
        %v582 = vsel %vm208, %v579, 0
        %v585 = vsel %vm208, %v580, 0
        %587 = vmatprep.subr.mxu0 0.0
        %588 = vmatpush1.msra.mxu0 0.0
        %589 = vmatprep.subr.mxu0 0.0
        %590 = vmatpush1.msra.mxu0 0.0
        %591 = vmatprep.subr.mxu0 0.0
        %592 = vmatpush1.msra.mxu0 0.0
        %593 = vmatprep.subr.mxu0 0.0
        %594 = vmatpush1.msra.mxu0 0.0
        %595 = vmatprep.subr.mxu0 0.0
        %596 = vmatpush1.msra.mxu0 0.0
        %597 = vmatprep.subr.mxu0 0.0
        %598 = vmatpush1.msra.mxu0 0.0
        %599 = vmatprep.subr.mxu0 0.0
        %600 = vmatpush1.msra.mxu0 0.0
        %601 = vmatprep.subr.mxu0 0.0
        %602 = vmatpush1.msra.mxu0 0.0
        %603 = vmatprep.subr.mxu0 0.0
        %604 = vmatpush1.msra.mxu0 0.0
        %605 = vmatprep.subr.mxu0 0.0
        %606 = vmatpush1.msra.mxu0 0.0
        %607 = vmatprep.subr.mxu0 0.0
        %608 = vmatpush1.msra.mxu0 0.0
        %609 = vmatprep.subr.mxu0 0.0
        %610 = vmatpush1.msra.mxu0 0.0
        %611 = vmatprep.subr.mxu0 0.0
        %612 = vmatpush1.msra.mxu0 0.0
        %613 = vmatprep.subr.mxu0 0.0
        %614 = vmatpush1.msra.mxu0 0.0
        %615 = vmatprep.subr.mxu0 0.0
        %616 = vmatpush1.msra.mxu0 %v203
        %617 = vmatprep.subr.mxu0 0.0
        %618 = vmatpush1.msra.mxu0 %v202
        %619 = vmatprep.subr.mxu0 0.0
        %620 = vmatpush2.msra.mxu0 0.0
        %621 = vmatprep.subr.mxu0 0.0
        %622 = vmatpush2.msra.mxu0 0.0
        %623 = vmatprep.subr.mxu0 0.0
        %624 = vmatpush2.msra.mxu0 0.0
        %625 = vmatprep.subr.mxu0 0.0
        %626 = vmatpush2.msra.mxu0 0.0
        %627 = vmatprep.subr.mxu0 0.0
        %628 = vmatpush2.msra.mxu0 0.0
        %629 = vmatprep.subr.mxu0 0.0
        %630 = vmatpush2.msra.mxu0 0.0
        %631 = vmatprep.subr.mxu0 0.0
        %632 = vmatpush2.msra.mxu0 0.0
        %633 = vmatprep.subr.mxu0 0.0
        %634 = vmatpush2.msra.mxu0 0.0
        %635 = vmatprep.subr.mxu0 0.0
        %636 = vmatpush2.msra.mxu0 0.0
        %637 = vmatprep.subr.mxu0 0.0
        %638 = vmatpush2.msra.mxu0 0.0
        %639 = vmatprep.subr.mxu0 0.0
        %640 = vmatpush2.msra.mxu0 0.0
        %641 = vmatprep.subr.mxu0 0.0
        %642 = vmatpush2.msra.mxu0 0.0
        %643 = vmatprep.subr.mxu0 0.0
        %644 = vmatpush2.msra.mxu0 0.0
        %645 = vmatprep.subr.mxu0 0.0
        %646 = vmatpush2.msra.mxu0 0.0
        %647 = vmatprep.subr.mxu0 0.0
        %648 = vmatpush2.msra.mxu0 0.0
        %649 = vmatprep.subr.mxu0 0.0
        %650 = vmatpush2.msra.mxu0 0.0
        %651 = vmatprep.mubr.f32.mxu0 0.0
        %652 = vmatmul.mubr.f32.gmra.mxu0 %v582
        %v653 = vpop.f32.mrf.mxu0
        %v654 = vadd.f32 0.0, %v653
        %v655 = vpop.f32.mrf.mxu0
        %656 = vmatprep.mubr.f32.mxu0 0.0
        %657 = vmatmul.mubr.f32.gmra.mxu0 %v585
        %v658 = vpop.f32.mrf.mxu0
        %v659 = vadd.f32 0.0, %v658
        %v660 = vpop.f32.mrf.mxu0
        %661 = vdwg.mxu0
        %vm662 = vcmp.gt.f32.partialorder %v654, 0.0
        %vm663 = vcmp.gt.f32.partialorder %v659, 0.0
        %vm664 = vcmp.lt.s32.totalorder %v575, 0
        %vm665 = vcmp.lt.s32.totalorder %v576, 0
        %vm666 = vmand %vm662, %vm664
        %vm667 = vmand %vm663, %vm665
        %v668 = vsel %vm666, 6, %v575
        %v669 = vsel %vm667, 6, %v576
        %v670 = vsel %vm662, 1, 0
        %v671 = vsel %vm663, 1, 0
        %v672 = vcvt.s32.f32 %v670
        %v673 = vcvt.s32.f32 %v671
        %v675 = vsel %vm208, %v672, 0
        %v678 = vsel %vm208, %v673, 0
        %680 = vmatprep.subr.mxu0 0.0
        %681 = vmatpush1.msra.mxu0 0.0
        %682 = vmatprep.subr.mxu0 0.0
        %683 = vmatpush1.msra.mxu0 0.0
        %684 = vmatprep.subr.mxu0 0.0
        %685 = vmatpush1.msra.mxu0 0.0
        %686 = vmatprep.subr.mxu0 0.0
        %687 = vmatpush1.msra.mxu0 0.0
        %688 = vmatprep.subr.mxu0 0.0
        %689 = vmatpush1.msra.mxu0 0.0
        %690 = vmatprep.subr.mxu0 0.0
        %691 = vmatpush1.msra.mxu0 0.0
        %692 = vmatprep.subr.mxu0 0.0
        %693 = vmatpush1.msra.mxu0 0.0
        %694 = vmatprep.subr.mxu0 0.0
        %695 = vmatpush1.msra.mxu0 0.0
        %696 = vmatprep.subr.mxu0 0.0
        %697 = vmatpush1.msra.mxu0 0.0
        %698 = vmatprep.subr.mxu0 0.0
        %699 = vmatpush1.msra.mxu0 0.0
        %700 = vmatprep.subr.mxu0 0.0
        %701 = vmatpush1.msra.mxu0 0.0
        %702 = vmatprep.subr.mxu0 0.0
        %703 = vmatpush1.msra.mxu0 0.0
        %704 = vmatprep.subr.mxu0 0.0
        %705 = vmatpush1.msra.mxu0 0.0
        %706 = vmatprep.subr.mxu0 0.0
        %707 = vmatpush1.msra.mxu0 0.0
        %708 = vmatprep.subr.mxu0 0.0
        %709 = vmatpush1.msra.mxu0 %v203
        %710 = vmatprep.subr.mxu0 0.0
        %711 = vmatpush1.msra.mxu0 %v202
        %712 = vmatprep.subr.mxu0 0.0
        %713 = vmatpush2.msra.mxu0 0.0
        %714 = vmatprep.subr.mxu0 0.0
        %715 = vmatpush2.msra.mxu0 0.0
        %716 = vmatprep.subr.mxu0 0.0
        %717 = vmatpush2.msra.mxu0 0.0
        %718 = vmatprep.subr.mxu0 0.0
        %719 = vmatpush2.msra.mxu0 0.0
        %720 = vmatprep.subr.mxu0 0.0
        %721 = vmatpush2.msra.mxu0 0.0
        %722 = vmatprep.subr.mxu0 0.0
        %723 = vmatpush2.msra.mxu0 0.0
        %724 = vmatprep.subr.mxu0 0.0
        %725 = vmatpush2.msra.mxu0 0.0
        %726 = vmatprep.subr.mxu0 0.0
        %727 = vmatpush2.msra.mxu0 0.0
        %728 = vmatprep.subr.mxu0 0.0
        %729 = vmatpush2.msra.mxu0 0.0
        %730 = vmatprep.subr.mxu0 0.0
        %731 = vmatpush2.msra.mxu0 0.0
        %732 = vmatprep.subr.mxu0 0.0
        %733 = vmatpush2.msra.mxu0 0.0
        %734 = vmatprep.subr.mxu0 0.0
        %735 = vmatpush2.msra.mxu0 0.0
        %736 = vmatprep.subr.mxu0 0.0
        %737 = vmatpush2.msra.mxu0 0.0
        %738 = vmatprep.subr.mxu0 0.0
        %739 = vmatpush2.msra.mxu0 0.0
        %740 = vmatprep.subr.mxu0 0.0
        %741 = vmatpush2.msra.mxu0 0.0
        %742 = vmatprep.subr.mxu0 0.0
        %743 = vmatpush2.msra.mxu0 0.0
        %744 = vmatprep.mubr.f32.mxu0 0.0
        %745 = vmatmul.mubr.f32.gmra.mxu0 %v675
        %v746 = vpop.f32.mrf.mxu0
        %v747 = vadd.f32 0.0, %v746
        %v748 = vpop.f32.mrf.mxu0
        %749 = vmatprep.mubr.f32.mxu0 0.0
        %750 = vmatmul.mubr.f32.gmra.mxu0 %v678
        %v751 = vpop.f32.mrf.mxu0
        %v752 = vadd.f32 0.0, %v751
        %v753 = vpop.f32.mrf.mxu0
        %754 = vdwg.mxu0
        %vm755 = vcmp.gt.f32.partialorder %v747, 0.0
        %vm756 = vcmp.gt.f32.partialorder %v752, 0.0
        %vm757 = vcmp.lt.s32.totalorder %v668, 0
        %vm758 = vcmp.lt.s32.totalorder %v669, 0
        %vm759 = vmand %vm755, %vm757
        %vm760 = vmand %vm756, %vm758
        %v761 = vsel %vm759, 7, %v668
        %v762 = vsel %vm760, 7, %v669
        %v763 = vsel %vm755, 1, 0
        %v764 = vsel %vm756, 1, 0
        %v765 = vcvt.s32.f32 %v763
        %v766 = vcvt.s32.f32 %v764
        %v768 = vsel %vm208, %v765, 0
        %v771 = vsel %vm208, %v766, 0
        %773 = vmatprep.subr.mxu0 0.0
        %774 = vmatpush1.msra.mxu0 0.0
        %775 = vmatprep.subr.mxu0 0.0
        %776 = vmatpush1.msra.mxu0 0.0
        %777 = vmatprep.subr.mxu0 0.0
        %778 = vmatpush1.msra.mxu0 0.0
        %779 = vmatprep.subr.mxu0 0.0
        %780 = vmatpush1.msra.mxu0 0.0
        %781 = vmatprep.subr.mxu0 0.0
        %782 = vmatpush1.msra.mxu0 0.0
        %783 = vmatprep.subr.mxu0 0.0
        %784 = vmatpush1.msra.mxu0 0.0
        %785 = vmatprep.subr.mxu0 0.0
        %786 = vmatpush1.msra.mxu0 0.0
        %787 = vmatprep.subr.mxu0 0.0
        %788 = vmatpush1.msra.mxu0 0.0
        %789 = vmatprep.subr.mxu0 0.0
        %790 = vmatpush1.msra.mxu0 0.0
        %791 = vmatprep.subr.mxu0 0.0
        %792 = vmatpush1.msra.mxu0 0.0
        %793 = vmatprep.subr.mxu0 0.0
        %794 = vmatpush1.msra.mxu0 0.0
        %795 = vmatprep.subr.mxu0 0.0
        %796 = vmatpush1.msra.mxu0 0.0
        %797 = vmatprep.subr.mxu0 0.0
        %798 = vmatpush1.msra.mxu0 0.0
        %799 = vmatprep.subr.mxu0 0.0
        %800 = vmatpush1.msra.mxu0 0.0
        %801 = vmatprep.subr.mxu0 0.0
        %802 = vmatpush1.msra.mxu0 %v203
        %803 = vmatprep.subr.mxu0 0.0
        %804 = vmatpush1.msra.mxu0 %v202
        %805 = vmatprep.subr.mxu0 0.0
        %806 = vmatpush2.msra.mxu0 0.0
        %807 = vmatprep.subr.mxu0 0.0
        %808 = vmatpush2.msra.mxu0 0.0
        %809 = vmatprep.subr.mxu0 0.0
        %810 = vmatpush2.msra.mxu0 0.0
        %811 = vmatprep.subr.mxu0 0.0
        %812 = vmatpush2.msra.mxu0 0.0
        %813 = vmatprep.subr.mxu0 0.0
        %814 = vmatpush2.msra.mxu0 0.0
        %815 = vmatprep.subr.mxu0 0.0
        %816 = vmatpush2.msra.mxu0 0.0
        %817 = vmatprep.subr.mxu0 0.0
        %818 = vmatpush2.msra.mxu0 0.0
        %819 = vmatprep.subr.mxu0 0.0
        %820 = vmatpush2.msra.mxu0 0.0
        %821 = vmatprep.subr.mxu0 0.0
        %822 = vmatpush2.msra.mxu0 0.0
        %823 = vmatprep.subr.mxu0 0.0
        %824 = vmatpush2.msra.mxu0 0.0
        %825 = vmatprep.subr.mxu0 0.0
        %826 = vmatpush2.msra.mxu0 0.0
        %827 = vmatprep.subr.mxu0 0.0
        %828 = vmatpush2.msra.mxu0 0.0
        %829 = vmatprep.subr.mxu0 0.0
        %830 = vmatpush2.msra.mxu0 0.0
        %831 = vmatprep.subr.mxu0 0.0
        %832 = vmatpush2.msra.mxu0 0.0
        %833 = vmatprep.subr.mxu0 0.0
        %834 = vmatpush2.msra.mxu0 0.0
        %835 = vmatprep.subr.mxu0 0.0
        %836 = vmatpush2.msra.mxu0 0.0
        %837 = vmatprep.mubr.f32.mxu0 0.0
        %838 = vmatmul.mubr.f32.gmra.mxu0 %v768
        %v839 = vpop.f32.mrf.mxu0
        %v840 = vadd.f32 0.0, %v839
        %v841 = vpop.f32.mrf.mxu0
        %842 = vmatprep.mubr.f32.mxu0 0.0
        %843 = vmatmul.mubr.f32.gmra.mxu0 %v771
        %v844 = vpop.f32.mrf.mxu0
        %v845 = vadd.f32 0.0, %v844
        %v846 = vpop.f32.mrf.mxu0
        %847 = vdwg.mxu0
        %vm848 = vcmp.gt.f32.partialorder %v840, 0.0
        %vm849 = vcmp.gt.f32.partialorder %v845, 0.0
        %vm850 = vcmp.lt.s32.totalorder %v761, 0
        %vm851 = vcmp.lt.s32.totalorder %v762, 0
        %vm852 = vmand %vm848, %vm850
        %vm853 = vmand %vm849, %vm851
        %v854 = vsel %vm852, 8, %v761
        %v855 = vsel %vm853, 8, %v762
        %v856 = vsel %vm848, 1, 0
        %v857 = vsel %vm849, 1, 0
        %v858 = vcvt.s32.f32 %v856
        %v859 = vcvt.s32.f32 %v857
        %v861 = vsel %vm208, %v858, 0
        %v864 = vsel %vm208, %v859, 0
        %866 = vmatprep.subr.mxu0 0.0
        %867 = vmatpush1.msra.mxu0 0.0
        %868 = vmatprep.subr.mxu0 0.0
        %869 = vmatpush1.msra.mxu0 0.0
        %870 = vmatprep.subr.mxu0 0.0
        %871 = vmatpush1.msra.mxu0 0.0
        %872 = vmatprep.subr.mxu0 0.0
        %873 = vmatpush1.msra.mxu0 0.0
        %874 = vmatprep.subr.mxu0 0.0
        %875 = vmatpush1.msra.mxu0 0.0
        %876 = vmatprep.subr.mxu0 0.0
        %877 = vmatpush1.msra.mxu0 0.0
        %878 = vmatprep.subr.mxu0 0.0
        %879 = vmatpush1.msra.mxu0 0.0
        %880 = vmatprep.subr.mxu0 0.0
        %881 = vmatpush1.msra.mxu0 0.0
        %882 = vmatprep.subr.mxu0 0.0
        %883 = vmatpush1.msra.mxu0 0.0
        %884 = vmatprep.subr.mxu0 0.0
        %885 = vmatpush1.msra.mxu0 0.0
        %886 = vmatprep.subr.mxu0 0.0
        %887 = vmatpush1.msra.mxu0 0.0
        %888 = vmatprep.subr.mxu0 0.0
        %889 = vmatpush1.msra.mxu0 0.0
        %890 = vmatprep.subr.mxu0 0.0
        %891 = vmatpush1.msra.mxu0 0.0
        %892 = vmatprep.subr.mxu0 0.0
        %893 = vmatpush1.msra.mxu0 0.0
        %894 = vmatprep.subr.mxu0 0.0
        %895 = vmatpush1.msra.mxu0 %v203
        %896 = vmatprep.subr.mxu0 0.0
        %897 = vmatpush1.msra.mxu0 %v202
        %898 = vmatprep.subr.mxu0 0.0
        %899 = vmatpush2.msra.mxu0 0.0
        %900 = vmatprep.subr.mxu0 0.0
        %901 = vmatpush2.msra.mxu0 0.0
        %902 = vmatprep.subr.mxu0 0.0
        %903 = vmatpush2.msra.mxu0 0.0
        %904 = vmatprep.subr.mxu0 0.0
        %905 = vmatpush2.msra.mxu0 0.0
        %906 = vmatprep.subr.mxu0 0.0
        %907 = vmatpush2.msra.mxu0 0.0
        %908 = vmatprep.subr.mxu0 0.0
        %909 = vmatpush2.msra.mxu0 0.0
        %910 = vmatprep.subr.mxu0 0.0
        %911 = vmatpush2.msra.mxu0 0.0
        %912 = vmatprep.subr.mxu0 0.0
        %913 = vmatpush2.msra.mxu0 0.0
        %914 = vmatprep.subr.mxu0 0.0
        %915 = vmatpush2.msra.mxu0 0.0
        %916 = vmatprep.subr.mxu0 0.0
        %917 = vmatpush2.msra.mxu0 0.0
        %918 = vmatprep.subr.mxu0 0.0
        %919 = vmatpush2.msra.mxu0 0.0
        %920 = vmatprep.subr.mxu0 0.0
        %921 = vmatpush2.msra.mxu0 0.0
        %922 = vmatprep.subr.mxu0 0.0
        %923 = vmatpush2.msra.mxu0 0.0
        %924 = vmatprep.subr.mxu0 0.0
        %925 = vmatpush2.msra.mxu0 0.0
        %926 = vmatprep.subr.mxu0 0.0
        %927 = vmatpush2.msra.mxu0 0.0
        %928 = vmatprep.subr.mxu0 0.0
        %929 = vmatpush2.msra.mxu0 0.0
        %930 = vmatprep.mubr.f32.mxu0 0.0
        %931 = vmatmul.mubr.f32.gmra.mxu0 %v861
        %v932 = vpop.f32.mrf.mxu0
        %v933 = vadd.f32 0.0, %v932
        %v934 = vpop.f32.mrf.mxu0
        %935 = vmatprep.mubr.f32.mxu0 0.0
        %936 = vmatmul.mubr.f32.gmra.mxu0 %v864
        %v937 = vpop.f32.mrf.mxu0
        %v938 = vadd.f32 0.0, %v937
        %v939 = vpop.f32.mrf.mxu0
        %940 = vdwg.mxu0
        %vm941 = vcmp.gt.f32.partialorder %v933, 0.0
        %vm942 = vcmp.gt.f32.partialorder %v938, 0.0
        %vm943 = vcmp.lt.s32.totalorder %v854, 0
        %vm944 = vcmp.lt.s32.totalorder %v855, 0
        %vm945 = vmand %vm941, %vm943
        %vm946 = vmand %vm942, %vm944
        %v947 = vsel %vm945, 9, %v854
        %v948 = vsel %vm946, 9, %v855
        %v949 = vsel %vm941, 1, 0
        %v950 = vsel %vm942, 1, 0
        %v951 = vcvt.s32.f32 %v949
        %v952 = vcvt.s32.f32 %v950
        %v954 = vsel %vm208, %v951, 0
        %v957 = vsel %vm208, %v952, 0
        %959 = vmatprep.subr.mxu0 0.0
        %960 = vmatpush1.msra.mxu0 0.0
        %961 = vmatprep.subr.mxu0 0.0
        %962 = vmatpush1.msra.mxu0 0.0
        %963 = vmatprep.subr.mxu0 0.0
        %964 = vmatpush1.msra.mxu0 0.0
        %965 = vmatprep.subr.mxu0 0.0
        %966 = vmatpush1.msra.mxu0 0.0
        %967 = vmatprep.subr.mxu0 0.0
        %968 = vmatpush1.msra.mxu0 0.0
        %969 = vmatprep.subr.mxu0 0.0
        %970 = vmatpush1.msra.mxu0 0.0
        %971 = vmatprep.subr.mxu0 0.0
        %972 = vmatpush1.msra.mxu0 0.0
        %973 = vmatprep.subr.mxu0 0.0
        %974 = vmatpush1.msra.mxu0 0.0
        %975 = vmatprep.subr.mxu0 0.0
        %976 = vmatpush1.msra.mxu0 0.0
        %977 = vmatprep.subr.mxu0 0.0
        %978 = vmatpush1.msra.mxu0 0.0
        %979 = vmatprep.subr.mxu0 0.0
        %980 = vmatpush1.msra.mxu0 0.0
        %981 = vmatprep.subr.mxu0 0.0
        %982 = vmatpush1.msra.mxu0 0.0
        %983 = vmatprep.subr.mxu0 0.0
        %984 = vmatpush1.msra.mxu0 0.0
        %985 = vmatprep.subr.mxu0 0.0
        %986 = vmatpush1.msra.mxu0 0.0
        %987 = vmatprep.subr.mxu0 0.0
        %988 = vmatpush1.msra.mxu0 %v203
        %989 = vmatprep.subr.mxu0 0.0
        %990 = vmatpush1.msra.mxu0 %v202
        %991 = vmatprep.subr.mxu0 0.0
        %992 = vmatpush2.msra.mxu0 0.0
        %993 = vmatprep.subr.mxu0 0.0
        %994 = vmatpush2.msra.mxu0 0.0
        %995 = vmatprep.subr.mxu0 0.0
        %996 = vmatpush2.msra.mxu0 0.0
        %997 = vmatprep.subr.mxu0 0.0
        %998 = vmatpush2.msra.mxu0 0.0
        %999 = vmatprep.subr.mxu0 0.0
        %1000 = vmatpush2.msra.mxu0 0.0
        %1001 = vmatprep.subr.mxu0 0.0
        %1002 = vmatpush2.msra.mxu0 0.0
        %1003 = vmatprep.subr.mxu0 0.0
        %1004 = vmatpush2.msra.mxu0 0.0
        %1005 = vmatprep.subr.mxu0 0.0
        %1006 = vmatpush2.msra.mxu0 0.0
        %1007 = vmatprep.subr.mxu0 0.0
        %1008 = vmatpush2.msra.mxu0 0.0
        %1009 = vmatprep.subr.mxu0 0.0
        %1010 = vmatpush2.msra.mxu0 0.0
        %1011 = vmatprep.subr.mxu0 0.0
        %1012 = vmatpush2.msra.mxu0 0.0
        %1013 = vmatprep.subr.mxu0 0.0
        %1014 = vmatpush2.msra.mxu0 0.0
        %1015 = vmatprep.subr.mxu0 0.0
        %1016 = vmatpush2.msra.mxu0 0.0
        %1017 = vmatprep.subr.mxu0 0.0
        %1018 = vmatpush2.msra.mxu0 0.0
        %1019 = vmatprep.subr.mxu0 0.0
        %1020 = vmatpush2.msra.mxu0 0.0
        %1021 = vmatprep.subr.mxu0 0.0
        %1022 = vmatpush2.msra.mxu0 0.0
        %1023 = vmatprep.mubr.f32.mxu0 0.0
        %1024 = vmatmul.mubr.f32.gmra.mxu0 %v954
        %v1025 = vpop.f32.mrf.mxu0
        %v1026 = vadd.f32 0.0, %v1025
        %v1027 = vpop.f32.mrf.mxu0
        %1028 = vmatprep.mubr.f32.mxu0 0.0
        %1029 = vmatmul.mubr.f32.gmra.mxu0 %v957
        %v1030 = vpop.f32.mrf.mxu0
        %v1031 = vadd.f32 0.0, %v1030
        %v1032 = vpop.f32.mrf.mxu0
        %1033 = vdwg.mxu0
        %vm1034 = vcmp.gt.f32.partialorder %v1026, 0.0
        %vm1035 = vcmp.gt.f32.partialorder %v1031, 0.0
        %vm1036 = vcmp.lt.s32.totalorder %v947, 0
        %vm1037 = vcmp.lt.s32.totalorder %v948, 0
        %vm1038 = vmand %vm1034, %vm1036
        %vm1039 = vmand %vm1035, %vm1037
        %v1040 = vsel %vm1038, 10, %v947
        %v1041 = vsel %vm1039, 10, %v948
        %v1042 = vsel %vm1034, 1, 0
        %v1043 = vsel %vm1035, 1, 0
        %v1044 = vcvt.s32.f32 %v1042
        %v1045 = vcvt.s32.f32 %v1043
        %v1047 = vsel %vm208, %v1044, 0
        %v1050 = vsel %vm208, %v1045, 0
        %1052 = vmatprep.subr.mxu0 0.0
        %1053 = vmatpush1.msra.mxu0 0.0
        %1054 = vmatprep.subr.mxu0 0.0
        %1055 = vmatpush1.msra.mxu0 0.0
        %1056 = vmatprep.subr.mxu0 0.0
        %1057 = vmatpush1.msra.mxu0 0.0
        %1058 = vmatprep.subr.mxu0 0.0
        %1059 = vmatpush1.msra.mxu0 0.0
        %1060 = vmatprep.subr.mxu0 0.0
        %1061 = vmatpush1.msra.mxu0 0.0
        %1062 = vmatprep.subr.mxu0 0.0
        %1063 = vmatpush1.msra.mxu0 0.0
        %1064 = vmatprep.subr.mxu0 0.0
        %1065 = vmatpush1.msra.mxu0 0.0
        %1066 = vmatprep.subr.mxu0 0.0
        %1067 = vmatpush1.msra.mxu0 0.0
        %1068 = vmatprep.subr.mxu0 0.0
        %1069 = vmatpush1.msra.mxu0 0.0
        %1070 = vmatprep.subr.mxu0 0.0
        %1071 = vmatpush1.msra.mxu0 0.0
        %1072 = vmatprep.subr.mxu0 0.0
        %1073 = vmatpush1.msra.mxu0 0.0
        %1074 = vmatprep.subr.mxu0 0.0
        %1075 = vmatpush1.msra.mxu0 0.0
        %1076 = vmatprep.subr.mxu0 0.0
        %1077 = vmatpush1.msra.mxu0 0.0
        %1078 = vmatprep.subr.mxu0 0.0
        %1079 = vmatpush1.msra.mxu0 0.0
        %1080 = vmatprep.subr.mxu0 0.0
        %1081 = vmatpush1.msra.mxu0 %v203
        %1082 = vmatprep.subr.mxu0 0.0
        %1083 = vmatpush1.msra.mxu0 %v202
        %1084 = vmatprep.subr.mxu0 0.0
        %1085 = vmatpush2.msra.mxu0 0.0
        %1086 = vmatprep.subr.mxu0 0.0
        %1087 = vmatpush2.msra.mxu0 0.0
        %1088 = vmatprep.subr.mxu0 0.0
        %1089 = vmatpush2.msra.mxu0 0.0
        %1090 = vmatprep.subr.mxu0 0.0
        %1091 = vmatpush2.msra.mxu0 0.0
        %1092 = vmatprep.subr.mxu0 0.0
        %1093 = vmatpush2.msra.mxu0 0.0
        %1094 = vmatprep.subr.mxu0 0.0
        %1095 = vmatpush2.msra.mxu0 0.0
        %1096 = vmatprep.subr.mxu0 0.0
        %1097 = vmatpush2.msra.mxu0 0.0
        %1098 = vmatprep.subr.mxu0 0.0
        %1099 = vmatpush2.msra.mxu0 0.0
        %1100 = vmatprep.subr.mxu0 0.0
        %1101 = vmatpush2.msra.mxu0 0.0
        %1102 = vmatprep.subr.mxu0 0.0
        %1103 = vmatpush2.msra.mxu0 0.0
        %1104 = vmatprep.subr.mxu0 0.0
        %1105 = vmatpush2.msra.mxu0 0.0
        %1106 = vmatprep.subr.mxu0 0.0
        %1107 = vmatpush2.msra.mxu0 0.0
        %1108 = vmatprep.subr.mxu0 0.0
        %1109 = vmatpush2.msra.mxu0 0.0
        %1110 = vmatprep.subr.mxu0 0.0
        %1111 = vmatpush2.msra.mxu0 0.0
        %1112 = vmatprep.subr.mxu0 0.0
        %1113 = vmatpush2.msra.mxu0 0.0
        %1114 = vmatprep.subr.mxu0 0.0
        %1115 = vmatpush2.msra.mxu0 0.0
        %1116 = vmatprep.mubr.f32.mxu0 0.0
        %1117 = vmatmul.mubr.f32.gmra.mxu0 %v1047
        %v1118 = vpop.f32.mrf.mxu0
        %v1119 = vadd.f32 0.0, %v1118
        %v1120 = vpop.f32.mrf.mxu0
        %1121 = vmatprep.mubr.f32.mxu0 0.0
        %1122 = vmatmul.mubr.f32.gmra.mxu0 %v1050
        %v1123 = vpop.f32.mrf.mxu0
        %v1124 = vadd.f32 0.0, %v1123
        %v1125 = vpop.f32.mrf.mxu0
        %1126 = vdwg.mxu0
        %vm1127 = vcmp.gt.f32.partialorder %v1119, 0.0
        %vm1128 = vcmp.gt.f32.partialorder %v1124, 0.0
        %vm1129 = vcmp.lt.s32.totalorder %v1040, 0
        %vm1130 = vcmp.lt.s32.totalorder %v1041, 0
        %vm1131 = vmand %vm1127, %vm1129
        %vm1132 = vmand %vm1128, %vm1130
        %v1133 = vsel %vm1131, 11, %v1040
        %v1134 = vsel %vm1132, 11, %v1041
        %v1135 = vsel %vm1127, 1, 0
        %v1136 = vsel %vm1128, 1, 0
        %v1137 = vcvt.s32.f32 %v1135
        %v1138 = vcvt.s32.f32 %v1136
        %v1140 = vsel %vm208, %v1137, 0
        %v1143 = vsel %vm208, %v1138, 0
        %1145 = vmatprep.subr.mxu0 0.0
        %1146 = vmatpush1.msra.mxu0 0.0
        %1147 = vmatprep.subr.mxu0 0.0
        %1148 = vmatpush1.msra.mxu0 0.0
        %1149 = vmatprep.subr.mxu0 0.0
        %1150 = vmatpush1.msra.mxu0 0.0
        %1151 = vmatprep.subr.mxu0 0.0
        %1152 = vmatpush1.msra.mxu0 0.0
        %1153 = vmatprep.subr.mxu0 0.0
        %1154 = vmatpush1.msra.mxu0 0.0
        %1155 = vmatprep.subr.mxu0 0.0
        %1156 = vmatpush1.msra.mxu0 0.0
        %1157 = vmatprep.subr.mxu0 0.0
        %1158 = vmatpush1.msra.mxu0 0.0
        %1159 = vmatprep.subr.mxu0 0.0
        %1160 = vmatpush1.msra.mxu0 0.0
        %1161 = vmatprep.subr.mxu0 0.0
        %1162 = vmatpush1.msra.mxu0 0.0
        %1163 = vmatprep.subr.mxu0 0.0
        %1164 = vmatpush1.msra.mxu0 0.0
        %1165 = vmatprep.subr.mxu0 0.0
        %1166 = vmatpush1.msra.mxu0 0.0
        %1167 = vmatprep.subr.mxu0 0.0
        %1168 = vmatpush1.msra.mxu0 0.0
        %1169 = vmatprep.subr.mxu0 0.0
        %1170 = vmatpush1.msra.mxu0 0.0
        %1171 = vmatprep.subr.mxu0 0.0
        %1172 = vmatpush1.msra.mxu0 0.0
        %1173 = vmatprep.subr.mxu0 0.0
        %1174 = vmatpush1.msra.mxu0 %v203
        %1175 = vmatprep.subr.mxu0 0.0
        %1176 = vmatpush1.msra.mxu0 %v202
        %1177 = vmatprep.subr.mxu0 0.0
        %1178 = vmatpush2.msra.mxu0 0.0
        %1179 = vmatprep.subr.mxu0 0.0
        %1180 = vmatpush2.msra.mxu0 0.0
        %1181 = vmatprep.subr.mxu0 0.0
        %1182 = vmatpush2.msra.mxu0 0.0
        %1183 = vmatprep.subr.mxu0 0.0
        %1184 = vmatpush2.msra.mxu0 0.0
        %1185 = vmatprep.subr.mxu0 0.0
        %1186 = vmatpush2.msra.mxu0 0.0
        %1187 = vmatprep.subr.mxu0 0.0
        %1188 = vmatpush2.msra.mxu0 0.0
        %1189 = vmatprep.subr.mxu0 0.0
        %1190 = vmatpush2.msra.mxu0 0.0
        %1191 = vmatprep.subr.mxu0 0.0
        %1192 = vmatpush2.msra.mxu0 0.0
        %1193 = vmatprep.subr.mxu0 0.0
        %1194 = vmatpush2.msra.mxu0 0.0
        %1195 = vmatprep.subr.mxu0 0.0
        %1196 = vmatpush2.msra.mxu0 0.0
        %1197 = vmatprep.subr.mxu0 0.0
        %1198 = vmatpush2.msra.mxu0 0.0
        %1199 = vmatprep.subr.mxu0 0.0
        %1200 = vmatpush2.msra.mxu0 0.0
        %1201 = vmatprep.subr.mxu0 0.0
        %1202 = vmatpush2.msra.mxu0 0.0
        %1203 = vmatprep.subr.mxu0 0.0
        %1204 = vmatpush2.msra.mxu0 0.0
        %1205 = vmatprep.subr.mxu0 0.0
        %1206 = vmatpush2.msra.mxu0 0.0
        %1207 = vmatprep.subr.mxu0 0.0
        %1208 = vmatpush2.msra.mxu0 0.0
        %1209 = vmatprep.mubr.f32.mxu0 0.0
        %1210 = vmatmul.mubr.f32.gmra.mxu0 %v1140
        %v1211 = vpop.f32.mrf.mxu0
        %v1212 = vadd.f32 0.0, %v1211
        %v1213 = vpop.f32.mrf.mxu0
        %1214 = vmatprep.mubr.f32.mxu0 0.0
        %1215 = vmatmul.mubr.f32.gmra.mxu0 %v1143
        %v1216 = vpop.f32.mrf.mxu0
        %v1217 = vadd.f32 0.0, %v1216
        %v1218 = vpop.f32.mrf.mxu0
        %1219 = vdwg.mxu0
        %vm1220 = vcmp.gt.f32.partialorder %v1212, 0.0
        %vm1221 = vcmp.gt.f32.partialorder %v1217, 0.0
        %vm1222 = vcmp.lt.s32.totalorder %v1133, 0
        %vm1223 = vcmp.lt.s32.totalorder %v1134, 0
        %vm1224 = vmand %vm1220, %vm1222
        %vm1225 = vmand %vm1221, %vm1223
        %v1226 = vsel %vm1224, 12, %v1133
        %v1227 = vsel %vm1225, 12, %v1134
        %v1228 = vsel %vm1220, 1, 0
        %v1229 = vsel %vm1221, 1, 0
        %v1230 = vcvt.s32.f32 %v1228
        %v1231 = vcvt.s32.f32 %v1229
        %v1233 = vsel %vm208, %v1230, 0
        %v1236 = vsel %vm208, %v1231, 0
        %1238 = vmatprep.subr.mxu0 0.0
        %1239 = vmatpush1.msra.mxu0 0.0
        %1240 = vmatprep.subr.mxu0 0.0
        %1241 = vmatpush1.msra.mxu0 0.0
        %1242 = vmatprep.subr.mxu0 0.0
        %1243 = vmatpush1.msra.mxu0 0.0
        %1244 = vmatprep.subr.mxu0 0.0
        %1245 = vmatpush1.msra.mxu0 0.0
        %1246 = vmatprep.subr.mxu0 0.0
        %1247 = vmatpush1.msra.mxu0 0.0
        %1248 = vmatprep.subr.mxu0 0.0
        %1249 = vmatpush1.msra.mxu0 0.0
        %1250 = vmatprep.subr.mxu0 0.0
        %1251 = vmatpush1.msra.mxu0 0.0
        %1252 = vmatprep.subr.mxu0 0.0
        %1253 = vmatpush1.msra.mxu0 0.0
        %1254 = vmatprep.subr.mxu0 0.0
        %1255 = vmatpush1.msra.mxu0 0.0
        %1256 = vmatprep.subr.mxu0 0.0
        %1257 = vmatpush1.msra.mxu0 0.0
        %1258 = vmatprep.subr.mxu0 0.0
        %1259 = vmatpush1.msra.mxu0 0.0
        %1260 = vmatprep.subr.mxu0 0.0
        %1261 = vmatpush1.msra.mxu0 0.0
        %1262 = vmatprep.subr.mxu0 0.0
        %1263 = vmatpush1.msra.mxu0 0.0
        %1264 = vmatprep.subr.mxu0 0.0
        %1265 = vmatpush1.msra.mxu0 0.0
        %1266 = vmatprep.subr.mxu0 0.0
        %1267 = vmatpush1.msra.mxu0 %v203
        %1268 = vmatprep.subr.mxu0 0.0
        %1269 = vmatpush1.msra.mxu0 %v202
        %1270 = vmatprep.subr.mxu0 0.0
        %1271 = vmatpush2.msra.mxu0 0.0
        %1272 = vmatprep.subr.mxu0 0.0
        %1273 = vmatpush2.msra.mxu0 0.0
        %1274 = vmatprep.subr.mxu0 0.0
        %1275 = vmatpush2.msra.mxu0 0.0
        %1276 = vmatprep.subr.mxu0 0.0
        %1277 = vmatpush2.msra.mxu0 0.0
        %1278 = vmatprep.subr.mxu0 0.0
        %1279 = vmatpush2.msra.mxu0 0.0
        %1280 = vmatprep.subr.mxu0 0.0
        %1281 = vmatpush2.msra.mxu0 0.0
        %1282 = vmatprep.subr.mxu0 0.0
        %1283 = vmatpush2.msra.mxu0 0.0
        %1284 = vmatprep.subr.mxu0 0.0
        %1285 = vmatpush2.msra.mxu0 0.0
        %1286 = vmatprep.subr.mxu0 0.0
        %1287 = vmatpush2.msra.mxu0 0.0
        %1288 = vmatprep.subr.mxu0 0.0
        %1289 = vmatpush2.msra.mxu0 0.0
        %1290 = vmatprep.subr.mxu0 0.0
        %1291 = vmatpush2.msra.mxu0 0.0
        %1292 = vmatprep.subr.mxu0 0.0
        %1293 = vmatpush2.msra.mxu0 0.0
        %1294 = vmatprep.subr.mxu0 0.0
        %1295 = vmatpush2.msra.mxu0 0.0
        %1296 = vmatprep.subr.mxu0 0.0
        %1297 = vmatpush2.msra.mxu0 0.0
        %1298 = vmatprep.subr.mxu0 0.0
        %1299 = vmatpush2.msra.mxu0 0.0
        %1300 = vmatprep.subr.mxu0 0.0
        %1301 = vmatpush2.msra.mxu0 0.0
        %1302 = vmatprep.mubr.f32.mxu0 0.0
        %1303 = vmatmul.mubr.f32.gmra.mxu0 %v1233
        %v1304 = vpop.f32.mrf.mxu0
        %v1305 = vadd.f32 0.0, %v1304
        %v1306 = vpop.f32.mrf.mxu0
        %1307 = vmatprep.mubr.f32.mxu0 0.0
        %1308 = vmatmul.mubr.f32.gmra.mxu0 %v1236
        %v1309 = vpop.f32.mrf.mxu0
        %v1310 = vadd.f32 0.0, %v1309
        %v1311 = vpop.f32.mrf.mxu0
        %1312 = vdwg.mxu0
        %vm1313 = vcmp.gt.f32.partialorder %v1305, 0.0
        %vm1314 = vcmp.gt.f32.partialorder %v1310, 0.0
        %vm1315 = vcmp.lt.s32.totalorder %v1226, 0
        %vm1316 = vcmp.lt.s32.totalorder %v1227, 0
        %vm1317 = vmand %vm1313, %vm1315
        %vm1318 = vmand %vm1314, %vm1316
        %v1319 = vsel %vm1317, 13, %v1226
        %v1320 = vsel %vm1318, 13, %v1227
        %v1321 = vsel %vm1313, 1, 0
        %v1322 = vsel %vm1314, 1, 0
        %v1323 = vcvt.s32.f32 %v1321
        %v1324 = vcvt.s32.f32 %v1322
        %v1326 = vsel %vm208, %v1323, 0
        %v1329 = vsel %vm208, %v1324, 0
        %1331 = vmatprep.subr.mxu0 0.0
        %1332 = vmatpush1.msra.mxu0 0.0
        %1333 = vmatprep.subr.mxu0 0.0
        %1334 = vmatpush1.msra.mxu0 0.0
        %1335 = vmatprep.subr.mxu0 0.0
        %1336 = vmatpush1.msra.mxu0 0.0
        %1337 = vmatprep.subr.mxu0 0.0
        %1338 = vmatpush1.msra.mxu0 0.0
        %1339 = vmatprep.subr.mxu0 0.0
        %1340 = vmatpush1.msra.mxu0 0.0
        %1341 = vmatprep.subr.mxu0 0.0
        %1342 = vmatpush1.msra.mxu0 0.0
        %1343 = vmatprep.subr.mxu0 0.0
        %1344 = vmatpush1.msra.mxu0 0.0
        %1345 = vmatprep.subr.mxu0 0.0
        %1346 = vmatpush1.msra.mxu0 0.0
        %1347 = vmatprep.subr.mxu0 0.0
        %1348 = vmatpush1.msra.mxu0 0.0
        %1349 = vmatprep.subr.mxu0 0.0
        %1350 = vmatpush1.msra.mxu0 0.0
        %1351 = vmatprep.subr.mxu0 0.0
        %1352 = vmatpush1.msra.mxu0 0.0
        %1353 = vmatprep.subr.mxu0 0.0
        %1354 = vmatpush1.msra.mxu0 0.0
        %1355 = vmatprep.subr.mxu0 0.0
        %1356 = vmatpush1.msra.mxu0 0.0
        %1357 = vmatprep.subr.mxu0 0.0
        %1358 = vmatpush1.msra.mxu0 0.0
        %1359 = vmatprep.subr.mxu0 0.0
        %1360 = vmatpush1.msra.mxu0 %v203
        %1361 = vmatprep.subr.mxu0 0.0
        %1362 = vmatpush1.msra.mxu0 %v202
        %1363 = vmatprep.subr.mxu0 0.0
        %1364 = vmatpush2.msra.mxu0 0.0
        %1365 = vmatprep.subr.mxu0 0.0
        %1366 = vmatpush2.msra.mxu0 0.0
        %1367 = vmatprep.subr.mxu0 0.0
        %1368 = vmatpush2.msra.mxu0 0.0
        %1369 = vmatprep.subr.mxu0 0.0
        %1370 = vmatpush2.msra.mxu0 0.0
        %1371 = vmatprep.subr.mxu0 0.0
        %1372 = vmatpush2.msra.mxu0 0.0
        %1373 = vmatprep.subr.mxu0 0.0
        %1374 = vmatpush2.msra.mxu0 0.0
        %1375 = vmatprep.subr.mxu0 0.0
        %1376 = vmatpush2.msra.mxu0 0.0
        %1377 = vmatprep.subr.mxu0 0.0
        %1378 = vmatpush2.msra.mxu0 0.0
        %1379 = vmatprep.subr.mxu0 0.0
        %1380 = vmatpush2.msra.mxu0 0.0
        %1381 = vmatprep.subr.mxu0 0.0
        %1382 = vmatpush2.msra.mxu0 0.0
        %1383 = vmatprep.subr.mxu0 0.0
        %1384 = vmatpush2.msra.mxu0 0.0
        %1385 = vmatprep.subr.mxu0 0.0
        %1386 = vmatpush2.msra.mxu0 0.0
        %1387 = vmatprep.subr.mxu0 0.0
        %1388 = vmatpush2.msra.mxu0 0.0
        %1389 = vmatprep.subr.mxu0 0.0
        %1390 = vmatpush2.msra.mxu0 0.0
        %1391 = vmatprep.subr.mxu0 0.0
        %1392 = vmatpush2.msra.mxu0 0.0
        %1393 = vmatprep.subr.mxu0 0.0
        %1394 = vmatpush2.msra.mxu0 0.0
        %1395 = vmatprep.mubr.f32.mxu0 0.0
        %1396 = vmatmul.mubr.f32.gmra.mxu0 %v1326
        %v1397 = vpop.f32.mrf.mxu0
        %v1398 = vadd.f32 0.0, %v1397
        %v1399 = vpop.f32.mrf.mxu0
        %1400 = vmatprep.mubr.f32.mxu0 0.0
        %1401 = vmatmul.mubr.f32.gmra.mxu0 %v1329
        %v1402 = vpop.f32.mrf.mxu0
        %v1403 = vadd.f32 0.0, %v1402
        %v1404 = vpop.f32.mrf.mxu0
        %1405 = vdwg.mxu0
        %vm1406 = vcmp.gt.f32.partialorder %v1398, 0.0
        %vm1407 = vcmp.gt.f32.partialorder %v1403, 0.0
        %vm1408 = vcmp.lt.s32.totalorder %v1319, 0
        %vm1409 = vcmp.lt.s32.totalorder %v1320, 0
        %vm1410 = vmand %vm1406, %vm1408
        %vm1411 = vmand %vm1407, %vm1409
        %v1412 = vsel %vm1410, 14, %v1319
        %v1413 = vsel %vm1411, 14, %v1320
        %v1414 = vsel %vm1406, 1, 0
        %v1415 = vsel %vm1407, 1, 0
        %v1416 = vcvt.s32.f32 %v1414
        %v1417 = vcvt.s32.f32 %v1415
        %v1419 = vsel %vm208, %v1416, 0
        %v1422 = vsel %vm208, %v1417, 0
        %1424 = vmatprep.subr.mxu0 0.0
        %1425 = vmatpush1.msra.mxu0 0.0
        %1426 = vmatprep.subr.mxu0 0.0
        %1427 = vmatpush1.msra.mxu0 0.0
        %1428 = vmatprep.subr.mxu0 0.0
        %1429 = vmatpush1.msra.mxu0 0.0
        %1430 = vmatprep.subr.mxu0 0.0
        %1431 = vmatpush1.msra.mxu0 0.0
        %1432 = vmatprep.subr.mxu0 0.0
        %1433 = vmatpush1.msra.mxu0 0.0
        %1434 = vmatprep.subr.mxu0 0.0
        %1435 = vmatpush1.msra.mxu0 0.0
        %1436 = vmatprep.subr.mxu0 0.0
        %1437 = vmatpush1.msra.mxu0 0.0
        %1438 = vmatprep.subr.mxu0 0.0
        %1439 = vmatpush1.msra.mxu0 0.0
        %1440 = vmatprep.subr.mxu0 0.0
        %1441 = vmatpush1.msra.mxu0 0.0
        %1442 = vmatprep.subr.mxu0 0.0
        %1443 = vmatpush1.msra.mxu0 0.0
        %1444 = vmatprep.subr.mxu0 0.0
        %1445 = vmatpush1.msra.mxu0 0.0
        %1446 = vmatprep.subr.mxu0 0.0
        %1447 = vmatpush1.msra.mxu0 0.0
        %1448 = vmatprep.subr.mxu0 0.0
        %1449 = vmatpush1.msra.mxu0 0.0
        %1450 = vmatprep.subr.mxu0 0.0
        %1451 = vmatpush1.msra.mxu0 0.0
        %1452 = vmatprep.subr.mxu0 0.0
        %1453 = vmatpush1.msra.mxu0 %v203
        %1454 = vmatprep.subr.mxu0 0.0
        %1455 = vmatpush1.msra.mxu0 %v202
        %1456 = vmatprep.subr.mxu0 0.0
        %1457 = vmatpush2.msra.mxu0 0.0
        %1458 = vmatprep.subr.mxu0 0.0
        %1459 = vmatpush2.msra.mxu0 0.0
        %1460 = vmatprep.subr.mxu0 0.0
        %1461 = vmatpush2.msra.mxu0 0.0
        %1462 = vmatprep.subr.mxu0 0.0
        %1463 = vmatpush2.msra.mxu0 0.0
        %1464 = vmatprep.subr.mxu0 0.0
        %1465 = vmatpush2.msra.mxu0 0.0
        %1466 = vmatprep.subr.mxu0 0.0
        %1467 = vmatpush2.msra.mxu0 0.0
        %1468 = vmatprep.subr.mxu0 0.0
        %1469 = vmatpush2.msra.mxu0 0.0
        %1470 = vmatprep.subr.mxu0 0.0
        %1471 = vmatpush2.msra.mxu0 0.0
        %1472 = vmatprep.subr.mxu0 0.0
        %1473 = vmatpush2.msra.mxu0 0.0
        %1474 = vmatprep.subr.mxu0 0.0
        %1475 = vmatpush2.msra.mxu0 0.0
        %1476 = vmatprep.subr.mxu0 0.0
        %1477 = vmatpush2.msra.mxu0 0.0
        %1478 = vmatprep.subr.mxu0 0.0
        %1479 = vmatpush2.msra.mxu0 0.0
        %1480 = vmatprep.subr.mxu0 0.0
        %1481 = vmatpush2.msra.mxu0 0.0
        %1482 = vmatprep.subr.mxu0 0.0
        %1483 = vmatpush2.msra.mxu0 0.0
        %1484 = vmatprep.subr.mxu0 0.0
        %1485 = vmatpush2.msra.mxu0 0.0
        %1486 = vmatprep.subr.mxu0 0.0
        %1487 = vmatpush2.msra.mxu0 0.0
        %1488 = vmatprep.mubr.f32.mxu0 0.0
        %1489 = vmatmul.mubr.f32.gmra.mxu0 %v1419
        %v1490 = vpop.f32.mrf.mxu0
        %v1491 = vadd.f32 0.0, %v1490
        %v1492 = vpop.f32.mrf.mxu0
        %1493 = vmatprep.mubr.f32.mxu0 0.0
        %1494 = vmatmul.mubr.f32.gmra.mxu0 %v1422
        %v1495 = vpop.f32.mrf.mxu0
        %v1496 = vadd.f32 0.0, %v1495
        %v1497 = vpop.f32.mrf.mxu0
        %1498 = vdwg.mxu0
        %vm1499 = vcmp.gt.f32.partialorder %v1491, 0.0
        %vm1500 = vcmp.gt.f32.partialorder %v1496, 0.0
        %vm1501 = vcmp.lt.s32.totalorder %v1412, 0
        %vm1502 = vcmp.lt.s32.totalorder %v1413, 0
        %vm1503 = vmand %vm1499, %vm1501
        %vm1504 = vmand %vm1500, %vm1502
        %v1505 = vsel %vm1503, 15, %v1412
        %v1506 = vsel %vm1504, 15, %v1413
        %v1507 = vsel %vm194, %v1505, 4294967295
        %v1508 = vsel %vm195, %v1506, 4294967295
        %vm1509 = vcmp.gt.s32.totalorder %v1507, 4294967295
        %v1510 = vsel %vm1509, %v1507, 4294967295
        %vm1511 = vcmp.gt.s32.totalorder %v1508, 4294967295
        %v1512 = vsel %vm1511, %v1508, 4294967295
        %vm1513 = vcmp.lt.s32.totalorder %v1510, 2
        %v1514 = vsel %vm1513, %v1510, 2
        %vm1515 = vcmp.lt.s32.totalorder %v1512, 2
        %v1516 = vsel %vm1515, %v1512, 2
        %v1517 = vadd.s32 %v1514, 1
        %v1518 = vadd.s32 %v1516, 1
        %v1519 = vld [vmem:[#allocation7] sm:$0xf]
        %vm1520 = vcmp.eq.s32.totalorder %v1517, 0
        %vm1521 = vcmp.eq.s32.totalorder %v1518, 0
        %v1522 = vsel %vm1520, 1, 0
        %v1523 = vsel %vm1521, 1, 0
        %v1524 = vcvt.s32.f32 %v1522
        %v1525 = vcvt.s32.f32 %v1523
        %v1526 = vlaneseq
        %v1527 = vshrl.u32 %v1526, 7
        %v1528 = vsub.s32 0, %v1527
        %v1529 = vrot.slane %v1524, %v1528
        %1531 = vbcast.lane.b32.xlu0 %v1529, 256
        %v1532 = vpop.permute.xlu0 %1531
        %s1534 = sor.u32 256, 8
        %1535 = vbcast.lane.b32.xlu0 %v1529, %s1534
        %v1536 = vpop.permute.xlu0 %1535
        %v1537 = vlaneseq
        %v1538 = vshrl.u32 %v1537, 7
        %v1539 = vsub.s32 1, %v1538
        %v1540 = vrot.slane %v1524, %v1539
        %1542 = vbcast.lane.b32.xlu0 %v1540, 256
        %v1543 = vpop.permute.xlu0 %1542
        %s1545 = sor.u32 256, 8
        %1546 = vbcast.lane.b32.xlu0 %v1540, %s1545
        %v1547 = vpop.permute.xlu0 %1546
        %v1548 = vlaneseq
        %v1549 = vshrl.u32 %v1548, 7
        %v1550 = vsub.s32 2, %v1549
        %v1551 = vrot.slane %v1524, %v1550
        %1553 = vbcast.lane.b32.xlu0 %v1551, 256
        %v1554 = vpop.permute.xlu0 %1553
        %s1556 = sor.u32 256, 8
        %1557 = vbcast.lane.b32.xlu0 %v1551, %s1556
        %v1558 = vpop.permute.xlu0 %1557
        %v1559 = vlaneseq
        %v1560 = vshrl.u32 %v1559, 7
        %v1561 = vsub.s32 3, %v1560
        %v1562 = vrot.slane %v1524, %v1561
        %1564 = vbcast.lane.b32.xlu0 %v1562, 256
        %v1565 = vpop.permute.xlu0 %1564
        %s1567 = sor.u32 256, 8
        %1568 = vbcast.lane.b32.xlu0 %v1562, %s1567
        %v1569 = vpop.permute.xlu0 %1568
        %v1570 = vlaneseq
        %v1571 = vshrl.u32 %v1570, 7
        %v1572 = vsub.s32 4, %v1571
        %v1573 = vrot.slane %v1524, %v1572
        %1575 = vbcast.lane.b32.xlu0 %v1573, 256
        %v1576 = vpop.permute.xlu0 %1575
        %s1578 = sor.u32 256, 8
        %1579 = vbcast.lane.b32.xlu0 %v1573, %s1578
        %v1580 = vpop.permute.xlu0 %1579
        %v1581 = vlaneseq
        %v1582 = vshrl.u32 %v1581, 7
        %v1583 = vsub.s32 5, %v1582
        %v1584 = vrot.slane %v1524, %v1583
        %1586 = vbcast.lane.b32.xlu0 %v1584, 256
        %v1587 = vpop.permute.xlu0 %1586
        %s1589 = sor.u32 256, 8
        %1590 = vbcast.lane.b32.xlu0 %v1584, %s1589
        %v1591 = vpop.permute.xlu0 %1590
        %v1592 = vlaneseq
        %v1593 = vshrl.u32 %v1592, 7
        %v1594 = vsub.s32 6, %v1593
        %v1595 = vrot.slane %v1524, %v1594
        %1597 = vbcast.lane.b32.xlu0 %v1595, 256
        %v1598 = vpop.permute.xlu0 %1597
        %s1600 = sor.u32 256, 8
        %1601 = vbcast.lane.b32.xlu0 %v1595, %s1600
        %v1602 = vpop.permute.xlu0 %1601
        %v1603 = vlaneseq
        %v1604 = vshrl.u32 %v1603, 7
        %v1605 = vsub.s32 7, %v1604
        %v1606 = vrot.slane %v1524, %v1605
        %1608 = vbcast.lane.b32.xlu0 %v1606, 256
        %v1609 = vpop.permute.xlu0 %1608
        %s1611 = sor.u32 256, 8
        %1612 = vbcast.lane.b32.xlu0 %v1606, %s1611
        %v1613 = vpop.permute.xlu0 %1612
        %v1614 = vlaneseq
        %v1615 = vshrl.u32 %v1614, 7
        %v1616 = vsub.s32 0, %v1615
        %v1617 = vrot.slane %v1525, %v1616
        %1619 = vbcast.lane.b32.xlu0 %v1617, 256
        %v1620 = vpop.permute.xlu0 %1619
        %s1622 = sor.u32 256, 8
        %1623 = vbcast.lane.b32.xlu0 %v1617, %s1622
        %v1624 = vpop.permute.xlu0 %1623
        %v1625 = vlaneseq
        %v1626 = vshrl.u32 %v1625, 7
        %v1627 = vsub.s32 1, %v1626
        %v1628 = vrot.slane %v1525, %v1627
        %1630 = vbcast.lane.b32.xlu0 %v1628, 256
        %v1631 = vpop.permute.xlu0 %1630
        %s1633 = sor.u32 256, 8
        %1634 = vbcast.lane.b32.xlu0 %v1628, %s1633
        %v1635 = vpop.permute.xlu0 %1634
        %v1636 = vlaneseq
        %v1637 = vshrl.u32 %v1636, 7
        %v1638 = vsub.s32 2, %v1637
        %v1639 = vrot.slane %v1525, %v1638
        %1641 = vbcast.lane.b32.xlu0 %v1639, 256
        %v1642 = vpop.permute.xlu0 %1641
        %s1644 = sor.u32 256, 8
        %1645 = vbcast.lane.b32.xlu0 %v1639, %s1644
        %v1646 = vpop.permute.xlu0 %1645
        %v1647 = vlaneseq
        %v1648 = vshrl.u32 %v1647, 7
        %v1649 = vsub.s32 3, %v1648
        %v1650 = vrot.slane %v1525, %v1649
        %1652 = vbcast.lane.b32.xlu0 %v1650, 256
        %v1653 = vpop.permute.xlu0 %1652
        %s1655 = sor.u32 256, 8
        %1656 = vbcast.lane.b32.xlu0 %v1650, %s1655
        %v1657 = vpop.permute.xlu0 %1656
        %v1658 = vlaneseq
        %v1659 = vshrl.u32 %v1658, 7
        %v1660 = vsub.s32 4, %v1659
        %v1661 = vrot.slane %v1525, %v1660
        %1663 = vbcast.lane.b32.xlu0 %v1661, 256
        %v1664 = vpop.permute.xlu0 %1663
        %s1666 = sor.u32 256, 8
        %1667 = vbcast.lane.b32.xlu0 %v1661, %s1666
        %v1668 = vpop.permute.xlu0 %1667
        %v1669 = vlaneseq
        %v1670 = vshrl.u32 %v1669, 7
        %v1671 = vsub.s32 5, %v1670
        %v1672 = vrot.slane %v1525, %v1671
        %1674 = vbcast.lane.b32.xlu0 %v1672, 256
        %v1675 = vpop.permute.xlu0 %1674
        %s1677 = sor.u32 256, 8
        %1678 = vbcast.lane.b32.xlu0 %v1672, %s1677
        %v1679 = vpop.permute.xlu0 %1678
        %v1680 = vlaneseq
        %v1681 = vshrl.u32 %v1680, 7
        %v1682 = vsub.s32 6, %v1681
        %v1683 = vrot.slane %v1525, %v1682
        %1685 = vbcast.lane.b32.xlu0 %v1683, 256
        %v1686 = vpop.permute.xlu0 %1685
        %s1688 = sor.u32 256, 8
        %1689 = vbcast.lane.b32.xlu0 %v1683, %s1688
        %v1690 = vpop.permute.xlu0 %1689
        %v1691 = vlaneseq
        %v1692 = vshrl.u32 %v1691, 7
        %v1693 = vsub.s32 7, %v1692
        %v1694 = vrot.slane %v1525, %v1693
        %1696 = vbcast.lane.b32.xlu0 %v1694, 256
        %v1697 = vpop.permute.xlu0 %1696
        %s1699 = sor.u32 256, 8
        %1700 = vbcast.lane.b32.xlu0 %v1694, %s1699
        %v1701 = vpop.permute.xlu0 %1700
        %v1702 = vlaneseq
        %v1703 = vshrl.u32 %v1702, 7
        %v1704 = vsub.s32 0, %v1703
        %v1705 = vrot.slane %v1519, %v1704
        %v1706 = vmul.f32 %v1532, %v1705
        %v1707 = vmul.f32 %v1536, %v1705
        %v1708 = vmul.f32 %v1543, %v1705
        %v1709 = vmul.f32 %v1547, %v1705
        %v1710 = vmul.f32 %v1554, %v1705
        %v1711 = vmul.f32 %v1558, %v1705
        %v1712 = vmul.f32 %v1565, %v1705
        %v1713 = vmul.f32 %v1569, %v1705
        %v1714 = vmul.f32 %v1576, %v1705
        %v1715 = vmul.f32 %v1580, %v1705
        %v1716 = vmul.f32 %v1587, %v1705
        %v1717 = vmul.f32 %v1591, %v1705
        %v1718 = vmul.f32 %v1598, %v1705
        %v1719 = vmul.f32 %v1602, %v1705
        %v1720 = vmul.f32 %v1609, %v1705
        %v1721 = vmul.f32 %v1613, %v1705
        %v1722 = vmul.f32 %v1620, %v1705
        %v1723 = vmul.f32 %v1624, %v1705
        %v1724 = vmul.f32 %v1631, %v1705
        %v1725 = vmul.f32 %v1635, %v1705
        %v1726 = vmul.f32 %v1642, %v1705
        %v1727 = vmul.f32 %v1646, %v1705
        %v1728 = vmul.f32 %v1653, %v1705
        %v1729 = vmul.f32 %v1657, %v1705
        %v1730 = vmul.f32 %v1664, %v1705
        %v1731 = vmul.f32 %v1668, %v1705
        %v1732 = vmul.f32 %v1675, %v1705
        %v1733 = vmul.f32 %v1679, %v1705
        %v1734 = vmul.f32 %v1686, %v1705
        %v1735 = vmul.f32 %v1690, %v1705
        %v1736 = vmul.f32 %v1697, %v1705
        %v1737 = vmul.f32 %v1701, %v1705
        %v1738 = vadd.f32 %v1706, 0.0
        %v1739 = vadd.f32 %v1707, 0.0
        %v1740 = vadd.f32 %v1708, 0.0
        %v1741 = vadd.f32 %v1709, 0.0
        %v1742 = vadd.f32 %v1710, 0.0
        %v1743 = vadd.f32 %v1711, 0.0
        %v1744 = vadd.f32 %v1712, 0.0
        %v1745 = vadd.f32 %v1713, 0.0
        %v1746 = vadd.f32 %v1714, 0.0
        %v1747 = vadd.f32 %v1715, 0.0
        %v1748 = vadd.f32 %v1716, 0.0
        %v1749 = vadd.f32 %v1717, 0.0
        %v1750 = vadd.f32 %v1718, 0.0
        %v1751 = vadd.f32 %v1719, 0.0
        %v1752 = vadd.f32 %v1720, 0.0
        %v1753 = vadd.f32 %v1721, 0.0
        %v1754 = vadd.f32 %v1722, 0.0
        %v1755 = vadd.f32 %v1723, 0.0
        %v1756 = vadd.f32 %v1724, 0.0
        %v1757 = vadd.f32 %v1725, 0.0
        %v1758 = vadd.f32 %v1726, 0.0
        %v1759 = vadd.f32 %v1727, 0.0
        %v1760 = vadd.f32 %v1728, 0.0
        %v1761 = vadd.f32 %v1729, 0.0
        %v1762 = vadd.f32 %v1730, 0.0
        %v1763 = vadd.f32 %v1731, 0.0
        %v1764 = vadd.f32 %v1732, 0.0
        %v1765 = vadd.f32 %v1733, 0.0
        %v1766 = vadd.f32 %v1734, 0.0
        %v1767 = vadd.f32 %v1735, 0.0
        %v1768 = vadd.f32 %v1736, 0.0
        %v1769 = vadd.f32 %v1737, 0.0
        %vm1770 = vcmp.eq.s32.totalorder %v1517, 1
        %vm1771 = vcmp.eq.s32.totalorder %v1518, 1
        %v1772 = vsel %vm1770, 1, 0
        %v1773 = vsel %vm1771, 1, 0
        %v1774 = vcvt.s32.f32 %v1772
        %v1775 = vcvt.s32.f32 %v1773
        %v1776 = vlaneseq
        %v1777 = vshrl.u32 %v1776, 7
        %v1778 = vsub.s32 0, %v1777
        %v1779 = vrot.slane %v1774, %v1778
        %1781 = vbcast.lane.b32.xlu0 %v1779, 256
        %v1782 = vpop.permute.xlu0 %1781
        %s1784 = sor.u32 256, 8
        %1785 = vbcast.lane.b32.xlu0 %v1779, %s1784
        %v1786 = vpop.permute.xlu0 %1785
        %v1787 = vlaneseq
        %v1788 = vshrl.u32 %v1787, 7
        %v1789 = vsub.s32 1, %v1788
        %v1790 = vrot.slane %v1774, %v1789
        %1792 = vbcast.lane.b32.xlu0 %v1790, 256
        %v1793 = vpop.permute.xlu0 %1792
        %s1795 = sor.u32 256, 8
        %1796 = vbcast.lane.b32.xlu0 %v1790, %s1795
        %v1797 = vpop.permute.xlu0 %1796
        %v1798 = vlaneseq
        %v1799 = vshrl.u32 %v1798, 7
        %v1800 = vsub.s32 2, %v1799
        %v1801 = vrot.slane %v1774, %v1800
        %1803 = vbcast.lane.b32.xlu0 %v1801, 256
        %v1804 = vpop.permute.xlu0 %1803
        %s1806 = sor.u32 256, 8
        %1807 = vbcast.lane.b32.xlu0 %v1801, %s1806
        %v1808 = vpop.permute.xlu0 %1807
        %v1809 = vlaneseq
        %v1810 = vshrl.u32 %v1809, 7
        %v1811 = vsub.s32 3, %v1810
        %v1812 = vrot.slane %v1774, %v1811
        %1814 = vbcast.lane.b32.xlu0 %v1812, 256
        %v1815 = vpop.permute.xlu0 %1814
        %s1817 = sor.u32 256, 8
        %1818 = vbcast.lane.b32.xlu0 %v1812, %s1817
        %v1819 = vpop.permute.xlu0 %1818
        %v1820 = vlaneseq
        %v1821 = vshrl.u32 %v1820, 7
        %v1822 = vsub.s32 4, %v1821
        %v1823 = vrot.slane %v1774, %v1822
        %1825 = vbcast.lane.b32.xlu0 %v1823, 256
        %v1826 = vpop.permute.xlu0 %1825
        %s1828 = sor.u32 256, 8
        %1829 = vbcast.lane.b32.xlu0 %v1823, %s1828
        %v1830 = vpop.permute.xlu0 %1829
        %v1831 = vlaneseq
        %v1832 = vshrl.u32 %v1831, 7
        %v1833 = vsub.s32 5, %v1832
        %v1834 = vrot.slane %v1774, %v1833
        %1836 = vbcast.lane.b32.xlu0 %v1834, 256
        %v1837 = vpop.permute.xlu0 %1836
        %s1839 = sor.u32 256, 8
        %1840 = vbcast.lane.b32.xlu0 %v1834, %s1839
        %v1841 = vpop.permute.xlu0 %1840
        %v1842 = vlaneseq
        %v1843 = vshrl.u32 %v1842, 7
        %v1844 = vsub.s32 6, %v1843
        %v1845 = vrot.slane %v1774, %v1844
        %1847 = vbcast.lane.b32.xlu0 %v1845, 256
        %v1848 = vpop.permute.xlu0 %1847
        %s1850 = sor.u32 256, 8
        %1851 = vbcast.lane.b32.xlu0 %v1845, %s1850
        %v1852 = vpop.permute.xlu0 %1851
        %v1853 = vlaneseq
        %v1854 = vshrl.u32 %v1853, 7
        %v1855 = vsub.s32 7, %v1854
        %v1856 = vrot.slane %v1774, %v1855
        %1858 = vbcast.lane.b32.xlu0 %v1856, 256
        %v1859 = vpop.permute.xlu0 %1858
        %s1861 = sor.u32 256, 8
        %1862 = vbcast.lane.b32.xlu0 %v1856, %s1861
        %v1863 = vpop.permute.xlu0 %1862
        %v1864 = vlaneseq
        %v1865 = vshrl.u32 %v1864, 7
        %v1866 = vsub.s32 0, %v1865
        %v1867 = vrot.slane %v1775, %v1866
        %1869 = vbcast.lane.b32.xlu0 %v1867, 256
        %v1870 = vpop.permute.xlu0 %1869
        %s1872 = sor.u32 256, 8
        %1873 = vbcast.lane.b32.xlu0 %v1867, %s1872
        %v1874 = vpop.permute.xlu0 %1873
        %v1875 = vlaneseq
        %v1876 = vshrl.u32 %v1875, 7
        %v1877 = vsub.s32 1, %v1876
        %v1878 = vrot.slane %v1775, %v1877
        %1880 = vbcast.lane.b32.xlu0 %v1878, 256
        %v1881 = vpop.permute.xlu0 %1880
        %s1883 = sor.u32 256, 8
        %1884 = vbcast.lane.b32.xlu0 %v1878, %s1883
        %v1885 = vpop.permute.xlu0 %1884
        %v1886 = vlaneseq
        %v1887 = vshrl.u32 %v1886, 7
        %v1888 = vsub.s32 2, %v1887
        %v1889 = vrot.slane %v1775, %v1888
        %1891 = vbcast.lane.b32.xlu0 %v1889, 256
        %v1892 = vpop.permute.xlu0 %1891
        %s1894 = sor.u32 256, 8
        %1895 = vbcast.lane.b32.xlu0 %v1889, %s1894
        %v1896 = vpop.permute.xlu0 %1895
        %v1897 = vlaneseq
        %v1898 = vshrl.u32 %v1897, 7
        %v1899 = vsub.s32 3, %v1898
        %v1900 = vrot.slane %v1775, %v1899
        %1902 = vbcast.lane.b32.xlu0 %v1900, 256
        %v1903 = vpop.permute.xlu0 %1902
        %s1905 = sor.u32 256, 8
        %1906 = vbcast.lane.b32.xlu0 %v1900, %s1905
        %v1907 = vpop.permute.xlu0 %1906
        %v1908 = vlaneseq
        %v1909 = vshrl.u32 %v1908, 7
        %v1910 = vsub.s32 4, %v1909
        %v1911 = vrot.slane %v1775, %v1910
        %1913 = vbcast.lane.b32.xlu0 %v1911, 256
        %v1914 = vpop.permute.xlu0 %1913
        %s1916 = sor.u32 256, 8
        %1917 = vbcast.lane.b32.xlu0 %v1911, %s1916
        %v1918 = vpop.permute.xlu0 %1917
        %v1919 = vlaneseq
        %v1920 = vshrl.u32 %v1919, 7
        %v1921 = vsub.s32 5, %v1920
        %v1922 = vrot.slane %v1775, %v1921
        %1924 = vbcast.lane.b32.xlu0 %v1922, 256
        %v1925 = vpop.permute.xlu0 %1924
        %s1927 = sor.u32 256, 8
        %1928 = vbcast.lane.b32.xlu0 %v1922, %s1927
        %v1929 = vpop.permute.xlu0 %1928
        %v1930 = vlaneseq
        %v1931 = vshrl.u32 %v1930, 7
        %v1932 = vsub.s32 6, %v1931
        %v1933 = vrot.slane %v1775, %v1932
        %1935 = vbcast.lane.b32.xlu0 %v1933, 256
        %v1936 = vpop.permute.xlu0 %1935
        %s1938 = sor.u32 256, 8
        %1939 = vbcast.lane.b32.xlu0 %v1933, %s1938
        %v1940 = vpop.permute.xlu0 %1939
        %v1941 = vlaneseq
        %v1942 = vshrl.u32 %v1941, 7
        %v1943 = vsub.s32 7, %v1942
        %v1944 = vrot.slane %v1775, %v1943
        %1946 = vbcast.lane.b32.xlu0 %v1944, 256
        %v1947 = vpop.permute.xlu0 %1946
        %s1949 = sor.u32 256, 8
        %1950 = vbcast.lane.b32.xlu0 %v1944, %s1949
        %v1951 = vpop.permute.xlu0 %1950
        %v1952 = vlaneseq
        %v1953 = vshrl.u32 %v1952, 7
        %v1954 = vsub.s32 1, %v1953
        %v1955 = vrot.slane %v1519, %v1954
        %v1956 = vmul.f32 %v1782, %v1955
        %v1957 = vmul.f32 %v1786, %v1955
        %v1958 = vmul.f32 %v1793, %v1955
        %v1959 = vmul.f32 %v1797, %v1955
        %v1960 = vmul.f32 %v1804, %v1955
        %v1961 = vmul.f32 %v1808, %v1955
        %v1962 = vmul.f32 %v1815, %v1955
        %v1963 = vmul.f32 %v1819, %v1955
        %v1964 = vmul.f32 %v1826, %v1955
        %v1965 = vmul.f32 %v1830, %v1955
        %v1966 = vmul.f32 %v1837, %v1955
        %v1967 = vmul.f32 %v1841, %v1955
        %v1968 = vmul.f32 %v1848, %v1955
        %v1969 = vmul.f32 %v1852, %v1955
        %v1970 = vmul.f32 %v1859, %v1955
        %v1971 = vmul.f32 %v1863, %v1955
        %v1972 = vmul.f32 %v1870, %v1955
        %v1973 = vmul.f32 %v1874, %v1955
        %v1974 = vmul.f32 %v1881, %v1955
        %v1975 = vmul.f32 %v1885, %v1955
        %v1976 = vmul.f32 %v1892, %v1955
        %v1977 = vmul.f32 %v1896, %v1955
        %v1978 = vmul.f32 %v1903, %v1955
        %v1979 = vmul.f32 %v1907, %v1955
        %v1980 = vmul.f32 %v1914, %v1955
        %v1981 = vmul.f32 %v1918, %v1955
        %v1982 = vmul.f32 %v1925, %v1955
        %v1983 = vmul.f32 %v1929, %v1955
        %v1984 = vmul.f32 %v1936, %v1955
        %v1985 = vmul.f32 %v1940, %v1955
        %v1986 = vmul.f32 %v1947, %v1955
        %v1987 = vmul.f32 %v1951, %v1955
        %v1988 = vadd.f32 %v1738, %v1956
        %v1989 = vadd.f32 %v1739, %v1957
        %v1990 = vadd.f32 %v1740, %v1958
        %v1991 = vadd.f32 %v1741, %v1959
        %v1992 = vadd.f32 %v1742, %v1960
        %v1993 = vadd.f32 %v1743, %v1961
        %v1994 = vadd.f32 %v1744, %v1962
        %v1995 = vadd.f32 %v1745, %v1963
        %v1996 = vadd.f32 %v1746, %v1964
        %v1997 = vadd.f32 %v1747, %v1965
        %v1998 = vadd.f32 %v1748, %v1966
        %v1999 = vadd.f32 %v1749, %v1967
        %v2000 = vadd.f32 %v1750, %v1968
        %v2001 = vadd.f32 %v1751, %v1969
        %v2002 = vadd.f32 %v1752, %v1970
        %v2003 = vadd.f32 %v1753, %v1971
        %v2004 = vadd.f32 %v1754, %v1972
        %v2005 = vadd.f32 %v1755, %v1973
        %v2006 = vadd.f32 %v1756, %v1974
        %v2007 = vadd.f32 %v1757, %v1975
        %v2008 = vadd.f32 %v1758, %v1976
        %v2009 = vadd.f32 %v1759, %v1977
        %v2010 = vadd.f32 %v1760, %v1978
        %v2011 = vadd.f32 %v1761, %v1979
        %v2012 = vadd.f32 %v1762, %v1980
        %v2013 = vadd.f32 %v1763, %v1981
        %v2014 = vadd.f32 %v1764, %v1982
        %v2015 = vadd.f32 %v1765, %v1983
        %v2016 = vadd.f32 %v1766, %v1984
        %v2017 = vadd.f32 %v1767, %v1985
        %v2018 = vadd.f32 %v1768, %v1986
        %v2019 = vadd.f32 %v1769, %v1987
        %vm2020 = vcmp.eq.s32.totalorder %v1517, 2
        %vm2021 = vcmp.eq.s32.totalorder %v1518, 2
        %v2022 = vsel %vm2020, 1, 0
        %v2023 = vsel %vm2021, 1, 0
        %v2024 = vcvt.s32.f32 %v2022
        %v2025 = vcvt.s32.f32 %v2023
        %v2026 = vlaneseq
        %v2027 = vshrl.u32 %v2026, 7
        %v2028 = vsub.s32 0, %v2027
        %v2029 = vrot.slane %v2024, %v2028
        %2031 = vbcast.lane.b32.xlu0 %v2029, 256
        %v2032 = vpop.permute.xlu0 %2031
        %s2034 = sor.u32 256, 8
        %2035 = vbcast.lane.b32.xlu0 %v2029, %s2034
        %v2036 = vpop.permute.xlu0 %2035
        %v2037 = vlaneseq
        %v2038 = vshrl.u32 %v2037, 7
        %v2039 = vsub.s32 1, %v2038
        %v2040 = vrot.slane %v2024, %v2039
        %2042 = vbcast.lane.b32.xlu0 %v2040, 256
        %v2043 = vpop.permute.xlu0 %2042
        %s2045 = sor.u32 256, 8
        %2046 = vbcast.lane.b32.xlu0 %v2040, %s2045
        %v2047 = vpop.permute.xlu0 %2046
        %v2048 = vlaneseq
        %v2049 = vshrl.u32 %v2048, 7
        %v2050 = vsub.s32 2, %v2049
        %v2051 = vrot.slane %v2024, %v2050
        %2053 = vbcast.lane.b32.xlu0 %v2051, 256
        %v2054 = vpop.permute.xlu0 %2053
        %s2056 = sor.u32 256, 8
        %2057 = vbcast.lane.b32.xlu0 %v2051, %s2056
        %v2058 = vpop.permute.xlu0 %2057
        %v2059 = vlaneseq
        %v2060 = vshrl.u32 %v2059, 7
        %v2061 = vsub.s32 3, %v2060
        %v2062 = vrot.slane %v2024, %v2061
        %2064 = vbcast.lane.b32.xlu0 %v2062, 256
        %v2065 = vpop.permute.xlu0 %2064
        %s2067 = sor.u32 256, 8
        %2068 = vbcast.lane.b32.xlu0 %v2062, %s2067
        %v2069 = vpop.permute.xlu0 %2068
        %v2070 = vlaneseq
        %v2071 = vshrl.u32 %v2070, 7
        %v2072 = vsub.s32 4, %v2071
        %v2073 = vrot.slane %v2024, %v2072
        %2075 = vbcast.lane.b32.xlu0 %v2073, 256
        %v2076 = vpop.permute.xlu0 %2075
        %s2078 = sor.u32 256, 8
        %2079 = vbcast.lane.b32.xlu0 %v2073, %s2078
        %v2080 = vpop.permute.xlu0 %2079
        %v2081 = vlaneseq
        %v2082 = vshrl.u32 %v2081, 7
        %v2083 = vsub.s32 5, %v2082
        %v2084 = vrot.slane %v2024, %v2083
        %2086 = vbcast.lane.b32.xlu0 %v2084, 256
        %v2087 = vpop.permute.xlu0 %2086
        %s2089 = sor.u32 256, 8
        %2090 = vbcast.lane.b32.xlu0 %v2084, %s2089
        %v2091 = vpop.permute.xlu0 %2090
        %v2092 = vlaneseq
        %v2093 = vshrl.u32 %v2092, 7
        %v2094 = vsub.s32 6, %v2093
        %v2095 = vrot.slane %v2024, %v2094
        %2097 = vbcast.lane.b32.xlu0 %v2095, 256
        %v2098 = vpop.permute.xlu0 %2097
        %s2100 = sor.u32 256, 8
        %2101 = vbcast.lane.b32.xlu0 %v2095, %s2100
        %v2102 = vpop.permute.xlu0 %2101
        %v2103 = vlaneseq
        %v2104 = vshrl.u32 %v2103, 7
        %v2105 = vsub.s32 7, %v2104
        %v2106 = vrot.slane %v2024, %v2105
        %2108 = vbcast.lane.b32.xlu0 %v2106, 256
        %v2109 = vpop.permute.xlu0 %2108
        %s2111 = sor.u32 256, 8
        %2112 = vbcast.lane.b32.xlu0 %v2106, %s2111
        %v2113 = vpop.permute.xlu0 %2112
        %v2114 = vlaneseq
        %v2115 = vshrl.u32 %v2114, 7
        %v2116 = vsub.s32 0, %v2115
        %v2117 = vrot.slane %v2025, %v2116
        %2119 = vbcast.lane.b32.xlu0 %v2117, 256
        %v2120 = vpop.permute.xlu0 %2119
        %s2122 = sor.u32 256, 8
        %2123 = vbcast.lane.b32.xlu0 %v2117, %s2122
        %v2124 = vpop.permute.xlu0 %2123
        %v2125 = vlaneseq
        %v2126 = vshrl.u32 %v2125, 7
        %v2127 = vsub.s32 1, %v2126
        %v2128 = vrot.slane %v2025, %v2127
        %2130 = vbcast.lane.b32.xlu0 %v2128, 256
        %v2131 = vpop.permute.xlu0 %2130
        %s2133 = sor.u32 256, 8
        %2134 = vbcast.lane.b32.xlu0 %v2128, %s2133
        %v2135 = vpop.permute.xlu0 %2134
        %v2136 = vlaneseq
        %v2137 = vshrl.u32 %v2136, 7
        %v2138 = vsub.s32 2, %v2137
        %v2139 = vrot.slane %v2025, %v2138
        %2141 = vbcast.lane.b32.xlu0 %v2139, 256
        %v2142 = vpop.permute.xlu0 %2141
        %s2144 = sor.u32 256, 8
        %2145 = vbcast.lane.b32.xlu0 %v2139, %s2144
        %v2146 = vpop.permute.xlu0 %2145
        %v2147 = vlaneseq
        %v2148 = vshrl.u32 %v2147, 7
        %v2149 = vsub.s32 3, %v2148
        %v2150 = vrot.slane %v2025, %v2149
        %2152 = vbcast.lane.b32.xlu0 %v2150, 256
        %v2153 = vpop.permute.xlu0 %2152
        %s2155 = sor.u32 256, 8
        %2156 = vbcast.lane.b32.xlu0 %v2150, %s2155
        %v2157 = vpop.permute.xlu0 %2156
        %v2158 = vlaneseq
        %v2159 = vshrl.u32 %v2158, 7
        %v2160 = vsub.s32 4, %v2159
        %v2161 = vrot.slane %v2025, %v2160
        %2163 = vbcast.lane.b32.xlu0 %v2161, 256
        %v2164 = vpop.permute.xlu0 %2163
        %s2166 = sor.u32 256, 8
        %2167 = vbcast.lane.b32.xlu0 %v2161, %s2166
        %v2168 = vpop.permute.xlu0 %2167
        %v2169 = vlaneseq
        %v2170 = vshrl.u32 %v2169, 7
        %v2171 = vsub.s32 5, %v2170
        %v2172 = vrot.slane %v2025, %v2171
        %2174 = vbcast.lane.b32.xlu0 %v2172, 256
        %v2175 = vpop.permute.xlu0 %2174
        %s2177 = sor.u32 256, 8
        %2178 = vbcast.lane.b32.xlu0 %v2172, %s2177
        %v2179 = vpop.permute.xlu0 %2178
        %v2180 = vlaneseq
        %v2181 = vshrl.u32 %v2180, 7
        %v2182 = vsub.s32 6, %v2181
        %v2183 = vrot.slane %v2025, %v2182
        %2185 = vbcast.lane.b32.xlu0 %v2183, 256
        %v2186 = vpop.permute.xlu0 %2185
        %s2188 = sor.u32 256, 8
        %2189 = vbcast.lane.b32.xlu0 %v2183, %s2188
        %v2190 = vpop.permute.xlu0 %2189
        %v2191 = vlaneseq
        %v2192 = vshrl.u32 %v2191, 7
        %v2193 = vsub.s32 7, %v2192
        %v2194 = vrot.slane %v2025, %v2193
        %2196 = vbcast.lane.b32.xlu0 %v2194, 256
        %v2197 = vpop.permute.xlu0 %2196
        %s2199 = sor.u32 256, 8
        %2200 = vbcast.lane.b32.xlu0 %v2194, %s2199
        %v2201 = vpop.permute.xlu0 %2200
        %v2202 = vlaneseq
        %v2203 = vshrl.u32 %v2202, 7
        %v2204 = vsub.s32 2, %v2203
        %v2205 = vrot.slane %v1519, %v2204
        %v2206 = vmul.f32 %v2032, %v2205
        %v2207 = vmul.f32 %v2036, %v2205
        %v2208 = vmul.f32 %v2043, %v2205
        %v2209 = vmul.f32 %v2047, %v2205
        %v2210 = vmul.f32 %v2054, %v2205
        %v2211 = vmul.f32 %v2058, %v2205
        %v2212 = vmul.f32 %v2065, %v2205
        %v2213 = vmul.f32 %v2069, %v2205
        %v2214 = vmul.f32 %v2076, %v2205
        %v2215 = vmul.f32 %v2080, %v2205
        %v2216 = vmul.f32 %v2087, %v2205
        %v2217 = vmul.f32 %v2091, %v2205
        %v2218 = vmul.f32 %v2098, %v2205
        %v2219 = vmul.f32 %v2102, %v2205
        %v2220 = vmul.f32 %v2109, %v2205
        %v2221 = vmul.f32 %v2113, %v2205
        %v2222 = vmul.f32 %v2120, %v2205
        %v2223 = vmul.f32 %v2124, %v2205
        %v2224 = vmul.f32 %v2131, %v2205
        %v2225 = vmul.f32 %v2135, %v2205
        %v2226 = vmul.f32 %v2142, %v2205
        %v2227 = vmul.f32 %v2146, %v2205
        %v2228 = vmul.f32 %v2153, %v2205
        %v2229 = vmul.f32 %v2157, %v2205
        %v2230 = vmul.f32 %v2164, %v2205
        %v2231 = vmul.f32 %v2168, %v2205
        %v2232 = vmul.f32 %v2175, %v2205
        %v2233 = vmul.f32 %v2179, %v2205
        %v2234 = vmul.f32 %v2186, %v2205
        %v2235 = vmul.f32 %v2190, %v2205
        %v2236 = vmul.f32 %v2197, %v2205
        %v2237 = vmul.f32 %v2201, %v2205
        %v2238 = vadd.f32 %v1988, %v2206
        %v2239 = vadd.f32 %v1989, %v2207
        %v2240 = vadd.f32 %v1990, %v2208
        %v2241 = vadd.f32 %v1991, %v2209
        %v2242 = vadd.f32 %v1992, %v2210
        %v2243 = vadd.f32 %v1993, %v2211
        %v2244 = vadd.f32 %v1994, %v2212
        %v2245 = vadd.f32 %v1995, %v2213
        %v2246 = vadd.f32 %v1996, %v2214
        %v2247 = vadd.f32 %v1997, %v2215
        %v2248 = vadd.f32 %v1998, %v2216
        %v2249 = vadd.f32 %v1999, %v2217
        %v2250 = vadd.f32 %v2000, %v2218
        %v2251 = vadd.f32 %v2001, %v2219
        %v2252 = vadd.f32 %v2002, %v2220
        %v2253 = vadd.f32 %v2003, %v2221
        %v2254 = vadd.f32 %v2004, %v2222
        %v2255 = vadd.f32 %v2005, %v2223
        %v2256 = vadd.f32 %v2006, %v2224
        %v2257 = vadd.f32 %v2007, %v2225
        %v2258 = vadd.f32 %v2008, %v2226
        %v2259 = vadd.f32 %v2009, %v2227
        %v2260 = vadd.f32 %v2010, %v2228
        %v2261 = vadd.f32 %v2011, %v2229
        %v2262 = vadd.f32 %v2012, %v2230
        %v2263 = vadd.f32 %v2013, %v2231
        %v2264 = vadd.f32 %v2014, %v2232
        %v2265 = vadd.f32 %v2015, %v2233
        %v2266 = vadd.f32 %v2016, %v2234
        %v2267 = vadd.f32 %v2017, %v2235
        %v2268 = vadd.f32 %v2018, %v2236
        %v2269 = vadd.f32 %v2019, %v2237
        %vm2270 = vcmp.eq.s32.totalorder %v1517, 3
        %vm2271 = vcmp.eq.s32.totalorder %v1518, 3
        %v2272 = vsel %vm2270, 1, 0
        %v2273 = vsel %vm2271, 1, 0
        %v2274 = vcvt.s32.f32 %v2272
        %v2275 = vcvt.s32.f32 %v2273
        %v2276 = vlaneseq
        %v2277 = vshrl.u32 %v2276, 7
        %v2278 = vsub.s32 0, %v2277
        %v2279 = vrot.slane %v2274, %v2278
        %2281 = vbcast.lane.b32.xlu0 %v2279, 256
        %v2282 = vpop.permute.xlu0 %2281
        %s2284 = sor.u32 256, 8
        %2285 = vbcast.lane.b32.xlu0 %v2279, %s2284
        %v2286 = vpop.permute.xlu0 %2285
        %v2287 = vlaneseq
        %v2288 = vshrl.u32 %v2287, 7
        %v2289 = vsub.s32 1, %v2288
        %v2290 = vrot.slane %v2274, %v2289
        %2292 = vbcast.lane.b32.xlu0 %v2290, 256
        %v2293 = vpop.permute.xlu0 %2292
        %s2295 = sor.u32 256, 8
        %2296 = vbcast.lane.b32.xlu0 %v2290, %s2295
        %v2297 = vpop.permute.xlu0 %2296
        %v2298 = vlaneseq
        %v2299 = vshrl.u32 %v2298, 7
        %v2300 = vsub.s32 2, %v2299
        %v2301 = vrot.slane %v2274, %v2300
        %2303 = vbcast.lane.b32.xlu0 %v2301, 256
        %v2304 = vpop.permute.xlu0 %2303
        %s2306 = sor.u32 256, 8
        %2307 = vbcast.lane.b32.xlu0 %v2301, %s2306
        %v2308 = vpop.permute.xlu0 %2307
        %v2309 = vlaneseq
        %v2310 = vshrl.u32 %v2309, 7
        %v2311 = vsub.s32 3, %v2310
        %v2312 = vrot.slane %v2274, %v2311
        %2314 = vbcast.lane.b32.xlu0 %v2312, 256
        %v2315 = vpop.permute.xlu0 %2314
        %s2317 = sor.u32 256, 8
        %2318 = vbcast.lane.b32.xlu0 %v2312, %s2317
        %v2319 = vpop.permute.xlu0 %2318
        %v2320 = vlaneseq
        %v2321 = vshrl.u32 %v2320, 7
        %v2322 = vsub.s32 4, %v2321
        %v2323 = vrot.slane %v2274, %v2322
        %2325 = vbcast.lane.b32.xlu0 %v2323, 256
        %v2326 = vpop.permute.xlu0 %2325
        %s2328 = sor.u32 256, 8
        %2329 = vbcast.lane.b32.xlu0 %v2323, %s2328
        %v2330 = vpop.permute.xlu0 %2329
        %v2331 = vlaneseq
        %v2332 = vshrl.u32 %v2331, 7
        %v2333 = vsub.s32 5, %v2332
        %v2334 = vrot.slane %v2274, %v2333
        %2336 = vbcast.lane.b32.xlu0 %v2334, 256
        %v2337 = vpop.permute.xlu0 %2336
        %s2339 = sor.u32 256, 8
        %2340 = vbcast.lane.b32.xlu0 %v2334, %s2339
        %v2341 = vpop.permute.xlu0 %2340
        %v2342 = vlaneseq
        %v2343 = vshrl.u32 %v2342, 7
        %v2344 = vsub.s32 6, %v2343
        %v2345 = vrot.slane %v2274, %v2344
        %2347 = vbcast.lane.b32.xlu0 %v2345, 256
        %v2348 = vpop.permute.xlu0 %2347
        %s2350 = sor.u32 256, 8
        %2351 = vbcast.lane.b32.xlu0 %v2345, %s2350
        %v2352 = vpop.permute.xlu0 %2351
        %v2353 = vlaneseq
        %v2354 = vshrl.u32 %v2353, 7
        %v2355 = vsub.s32 7, %v2354
        %v2356 = vrot.slane %v2274, %v2355
        %2358 = vbcast.lane.b32.xlu0 %v2356, 256
        %v2359 = vpop.permute.xlu0 %2358
        %s2361 = sor.u32 256, 8
        %2362 = vbcast.lane.b32.xlu0 %v2356, %s2361
        %v2363 = vpop.permute.xlu0 %2362
        %v2364 = vlaneseq
        %v2365 = vshrl.u32 %v2364, 7
        %v2366 = vsub.s32 0, %v2365
        %v2367 = vrot.slane %v2275, %v2366
        %2369 = vbcast.lane.b32.xlu0 %v2367, 256
        %v2370 = vpop.permute.xlu0 %2369
        %s2372 = sor.u32 256, 8
        %2373 = vbcast.lane.b32.xlu0 %v2367, %s2372
        %v2374 = vpop.permute.xlu0 %2373
        %v2375 = vlaneseq
        %v2376 = vshrl.u32 %v2375, 7
        %v2377 = vsub.s32 1, %v2376
        %v2378 = vrot.slane %v2275, %v2377
        %2380 = vbcast.lane.b32.xlu0 %v2378, 256
        %v2381 = vpop.permute.xlu0 %2380
        %s2383 = sor.u32 256, 8
        %2384 = vbcast.lane.b32.xlu0 %v2378, %s2383
        %v2385 = vpop.permute.xlu0 %2384
        %v2386 = vlaneseq
        %v2387 = vshrl.u32 %v2386, 7
        %v2388 = vsub.s32 2, %v2387
        %v2389 = vrot.slane %v2275, %v2388
        %2391 = vbcast.lane.b32.xlu0 %v2389, 256
        %v2392 = vpop.permute.xlu0 %2391
        %s2394 = sor.u32 256, 8
        %2395 = vbcast.lane.b32.xlu0 %v2389, %s2394
        %v2396 = vpop.permute.xlu0 %2395
        %v2397 = vlaneseq
        %v2398 = vshrl.u32 %v2397, 7
        %v2399 = vsub.s32 3, %v2398
        %v2400 = vrot.slane %v2275, %v2399
        %2402 = vbcast.lane.b32.xlu0 %v2400, 256
        %v2403 = vpop.permute.xlu0 %2402
        %s2405 = sor.u32 256, 8
        %2406 = vbcast.lane.b32.xlu0 %v2400, %s2405
        %v2407 = vpop.permute.xlu0 %2406
        %v2408 = vlaneseq
        %v2409 = vshrl.u32 %v2408, 7
        %v2410 = vsub.s32 4, %v2409
        %v2411 = vrot.slane %v2275, %v2410
        %2413 = vbcast.lane.b32.xlu0 %v2411, 256
        %v2414 = vpop.permute.xlu0 %2413
        %s2416 = sor.u32 256, 8
        %2417 = vbcast.lane.b32.xlu0 %v2411, %s2416
        %v2418 = vpop.permute.xlu0 %2417
        %v2419 = vlaneseq
        %v2420 = vshrl.u32 %v2419, 7
        %v2421 = vsub.s32 5, %v2420
        %v2422 = vrot.slane %v2275, %v2421
        %2424 = vbcast.lane.b32.xlu0 %v2422, 256
        %v2425 = vpop.permute.xlu0 %2424
        %s2427 = sor.u32 256, 8
        %2428 = vbcast.lane.b32.xlu0 %v2422, %s2427
        %v2429 = vpop.permute.xlu0 %2428
        %v2430 = vlaneseq
        %v2431 = vshrl.u32 %v2430, 7
        %v2432 = vsub.s32 6, %v2431
        %v2433 = vrot.slane %v2275, %v2432
        %2435 = vbcast.lane.b32.xlu0 %v2433, 256
        %v2436 = vpop.permute.xlu0 %2435
        %s2438 = sor.u32 256, 8
        %2439 = vbcast.lane.b32.xlu0 %v2433, %s2438
        %v2440 = vpop.permute.xlu0 %2439
        %v2441 = vlaneseq
        %v2442 = vshrl.u32 %v2441, 7
        %v2443 = vsub.s32 7, %v2442
        %v2444 = vrot.slane %v2275, %v2443
        %2446 = vbcast.lane.b32.xlu0 %v2444, 256
        %v2447 = vpop.permute.xlu0 %2446
        %s2449 = sor.u32 256, 8
        %2450 = vbcast.lane.b32.xlu0 %v2444, %s2449
        %v2451 = vpop.permute.xlu0 %2450
        %v2452 = vlaneseq
        %v2453 = vshrl.u32 %v2452, 7
        %v2454 = vsub.s32 3, %v2453
        %v2455 = vrot.slane %v1519, %v2454
        %v2456 = vmul.f32 %v2282, %v2455
        %v2457 = vmul.f32 %v2286, %v2455
        %v2458 = vmul.f32 %v2293, %v2455
        %v2459 = vmul.f32 %v2297, %v2455
        %v2460 = vmul.f32 %v2304, %v2455
        %v2461 = vmul.f32 %v2308, %v2455
        %v2462 = vmul.f32 %v2315, %v2455
        %v2463 = vmul.f32 %v2319, %v2455
        %v2464 = vmul.f32 %v2326, %v2455
        %v2465 = vmul.f32 %v2330, %v2455
        %v2466 = vmul.f32 %v2337, %v2455
        %v2467 = vmul.f32 %v2341, %v2455
        %v2468 = vmul.f32 %v2348, %v2455
        %v2469 = vmul.f32 %v2352, %v2455
        %v2470 = vmul.f32 %v2359, %v2455
        %v2471 = vmul.f32 %v2363, %v2455
        %v2472 = vmul.f32 %v2370, %v2455
        %v2473 = vmul.f32 %v2374, %v2455
        %v2474 = vmul.f32 %v2381, %v2455
        %v2475 = vmul.f32 %v2385, %v2455
        %v2476 = vmul.f32 %v2392, %v2455
        %v2477 = vmul.f32 %v2396, %v2455
        %v2478 = vmul.f32 %v2403, %v2455
        %v2479 = vmul.f32 %v2407, %v2455
        %v2480 = vmul.f32 %v2414, %v2455
        %v2481 = vmul.f32 %v2418, %v2455
        %v2482 = vmul.f32 %v2425, %v2455
        %v2483 = vmul.f32 %v2429, %v2455
        %v2484 = vmul.f32 %v2436, %v2455
        %v2485 = vmul.f32 %v2440, %v2455
        %v2486 = vmul.f32 %v2447, %v2455
        %v2487 = vmul.f32 %v2451, %v2455
        %v2488 = vadd.f32 %v2238, %v2456
        %v2489 = vadd.f32 %v2239, %v2457
        %v2490 = vadd.f32 %v2240, %v2458
        %v2491 = vadd.f32 %v2241, %v2459
        %v2492 = vadd.f32 %v2242, %v2460
        %v2493 = vadd.f32 %v2243, %v2461
        %v2494 = vadd.f32 %v2244, %v2462
        %v2495 = vadd.f32 %v2245, %v2463
        %v2496 = vadd.f32 %v2246, %v2464
        %v2497 = vadd.f32 %v2247, %v2465
        %v2498 = vadd.f32 %v2248, %v2466
        %v2499 = vadd.f32 %v2249, %v2467
        %v2500 = vadd.f32 %v2250, %v2468
        %v2501 = vadd.f32 %v2251, %v2469
        %v2502 = vadd.f32 %v2252, %v2470
        %v2503 = vadd.f32 %v2253, %v2471
        %v2504 = vadd.f32 %v2254, %v2472
        %v2505 = vadd.f32 %v2255, %v2473
        %v2506 = vadd.f32 %v2256, %v2474
        %v2507 = vadd.f32 %v2257, %v2475
        %v2508 = vadd.f32 %v2258, %v2476
        %v2509 = vadd.f32 %v2259, %v2477
        %v2510 = vadd.f32 %v2260, %v2478
        %v2511 = vadd.f32 %v2261, %v2479
        %v2512 = vadd.f32 %v2262, %v2480
        %v2513 = vadd.f32 %v2263, %v2481
        %v2514 = vadd.f32 %v2264, %v2482
        %v2515 = vadd.f32 %v2265, %v2483
        %v2516 = vadd.f32 %v2266, %v2484
        %v2517 = vadd.f32 %v2267, %v2485
        %v2518 = vadd.f32 %v2268, %v2486
        %v2519 = vadd.f32 %v2269, %v2487
        %2520 = vst [vmem:[%s179] sm:$0xff] %v2488
        %2521 = vst [vmem:[%s179 + $0x8] sm:$0xff] %v2489
        %2522 = vst [vmem:[%s179 + $0x10] sm:$0xff] %v2490
        %2523 = vst [vmem:[%s179 + $0x18] sm:$0xff] %v2491
        %2524 = vst [vmem:[%s179 + $0x20] sm:$0xff] %v2492
        %2525 = vst [vmem:[%s179 + $0x28] sm:$0xff] %v2493
        %2526 = vst [vmem:[%s179 + $0x30] sm:$0xff] %v2494
        %2527 = vst [vmem:[%s179 + $0x38] sm:$0xff] %v2495
        %2528 = vst [vmem:[%s179 + $0x40] sm:$0xff] %v2496
        %2529 = vst [vmem:[%s179 + $0x48] sm:$0xff] %v2497
        %2530 = vst [vmem:[%s179 + $0x50] sm:$0xff] %v2498
        %2531 = vst [vmem:[%s179 + $0x58] sm:$0xff] %v2499
        %2532 = vst [vmem:[%s179 + $0x60] sm:$0xff] %v2500
        %2533 = vst [vmem:[%s179 + $0x68] sm:$0xff] %v2501
        %2534 = vst [vmem:[%s179 + $0x70] sm:$0xff] %v2502
        %2535 = vst [vmem:[%s179 + $0x78] sm:$0xff] %v2503
        %2536 = vst [vmem:[%s179 + $0x80] sm:$0xff] %v2504
        %2537 = vst [vmem:[%s179 + $0x88] sm:$0xff] %v2505
        %2538 = vst [vmem:[%s179 + $0x90] sm:$0xff] %v2506
        %2539 = vst [vmem:[%s179 + $0x98] sm:$0xff] %v2507
        %2540 = vst [vmem:[%s179 + $0xa0] sm:$0xff] %v2508
        %2541 = vst [vmem:[%s179 + $0xa8] sm:$0xff] %v2509
        %2542 = vst [vmem:[%s179 + $0xb0] sm:$0xff] %v2510
        %2543 = vst [vmem:[%s179 + $0xb8] sm:$0xff] %v2511
        %2544 = vst [vmem:[%s179 + $0xc0] sm:$0xff] %v2512
        %2545 = vst [vmem:[%s179 + $0xc8] sm:$0xff] %v2513
        %2546 = vst [vmem:[%s179 + $0xd0] sm:$0xff] %v2514
        %2547 = vst [vmem:[%s179 + $0xd8] sm:$0xff] %v2515
        %2548 = vst [vmem:[%s179 + $0xe0] sm:$0xff] %v2516
        %2549 = vst [vmem:[%s179 + $0xe8] sm:$0xff] %v2517
        %2550 = vst [vmem:[%s179 + $0xf0] sm:$0xff] %v2518
        %2551 = vst [vmem:[%s179 + $0xf8] sm:$0xff] %v2519
        %s2552 = sand.u32 %s80, 1
        %s2553 = scalar_lea.sflag [#allocation6], %s2552
        %s2554 = sand.u32 %s80, 1
        %s2555 = smul.addr %s2554, 256
        %s2556 = scalar_lea.vmem [#allocation9], %s2555
        // Predicated region
        $region37: #{tpu_custom_call.1} parent=27 // pred_check
          %p2557 = pneg %p90
        $region38: #{tpu_custom_call.1} parent=27 // pred_check_branch
          %2559 = sbr.rel (%p2557) target = $region40
        $region39: #{tpu_custom_call.1} parent=27 // pred_region
          %s2561 = ssub.s32 4096, 4096
          %2562 = vsyncadd %s2553, %s2561
          %s2563 = smul.addr %s25, 32
          %s2564 = smul.addr %s2563, 128
          %s2565 = scalar_lea.hbm %s3, %s2564
          %s2566 = sshll.u32 %s2556, 4
          %s2567 = int_to_ptr.vmem [resolvable:$true] %s2566
          %2572 = dma.vmem_to_hbm [thread:$0]  %s2567, 4096, %s2565, %s2553, 128, 128, 8
        $region40: #{tpu_custom_call.1} parent=27 // pred_fallthru
          _
      $region28: #{tpu_custom_call.1} parent=5 // pred_fallthru
        _
      %p2573 = scmp.le.s32.totalorder 2, %s20
      // Predicated region
      $region41: #{tpu_custom_call.1} parent=5 // pred_check
        %p2574 = pneg %p2573
      $region42: #{tpu_custom_call.1} parent=5 // pred_check_branch
        %2576 = sbr.rel (%p2574) target = $region44
      $region43: #{tpu_custom_call.1} parent=5 // pred_region
        %s2577 = ssub.s32 %s20, 2
        // Predicated region
        $region45: #{tpu_custom_call.1} parent=43 // pred_check
          %p2578 = pneg %p96
        $region46: #{tpu_custom_call.1} parent=43 // pred_check_branch
          %2580 = sbr.rel (%p2578) target = $region48
        $region47: #{tpu_custom_call.1} parent=43 // pred_region
          %s2581 = sand.u32 %s81, 1
          %s2582 = scalar_lea.sflag [#allocation6], %s2581
          %s2583 = sand.u32 %s81, 1
          %s2584 = smul.addr %s2583, 256
          %s2585 = scalar_lea.vmem [#allocation9], %s2584
          %2586 = dma.done %s2582, 4096
        $region48: #{tpu_custom_call.1} parent=43 // pred_fallthru
          _
      $region44: #{tpu_custom_call.1} parent=5 // pred_fallthru
        _
    $region6: #{tpu_custom_call.1} parent=1 // loop_footer
      %s24 = sadd.s32 1, %s20
    $region7: #{tpu_custom_call.1} parent=1 // loop_footer_branch
      %19 = sbr.rel target = $region3
    $region8: #{tpu_custom_call.1} parent=1 // loop_exit
      _
    %2587 = vsyncpa [#allocation5], 1
    %s2588 = scalar_lea.sflag [#allocation5], 1
    %2589 = vsyncpa %s2588, 1
    %2590 = vsyncpa [#allocation8], 1
    %2591 = vsyncpa [#allocation6], 1
    %s2592 = scalar_lea.sflag [#allocation6], 1
    %2593 = vsyncpa %s2592, 1

</llo_original>
